<compile_context>
chip_gen: v5e
topology: v5e:2x2
jax: 0.10.0
libtpu: 0.0.40
codegen_flags: <defaults>
</compile_context>

<pallas_src>
import functools

import jax
import jax.numpy as jnp
from jax.experimental import pallas as pl
from jax.experimental.pallas import tpu as pltpu


def _fused_resblock_kernel(x_ref, w1_ref, s1_ref, b1_ref,
                           w2_ref, s2_ref, b2_ref, out_ref, yp_ref,
                           *, H, W):
    """Fused ResidualBlock forward for one batch element.

    x_ref:   (1, L, Cin)   flattened zero-padded NHWC input, L = (H+3)*(W+2)
    w?_ref:  (9, Cin, Cout) conv taps, tap index = ky*3 + kx
    s?/b?:   (1, Cout)      folded eval-mode BN scale / bias (f32)
    out_ref: (1, M, Cout)   "wide" output, M = H*(W+2); cols w >= W are garbage
    yp_ref:  (L, Cout)      mxu-dtype VMEM scratch holding the zero-bordered y1
    """
    Wp = W + 2
    M = H * Wp
    Cout = out_ref.shape[-1]

    # Valid-column mask generated in-kernel (no extra HBM input / DMA).
    col = jax.lax.broadcasted_iota(jnp.int32, (M, Cout), 0) % Wp
    valid = col < W

    # Zero only the never-written halo rows of the scratch.  Interior rows
    # (including the wrap columns, written as exact 0.0 below) are fully
    # overwritten every step, so this is all the re-initialization needed,
    # and it stays correct if the batch grid axis is split across TensorCores.
    yp_ref[pl.ds(0, Wp + 1), :] = jnp.zeros((Wp + 1, Cout), yp_ref.dtype)
    yp_ref[pl.ds(Wp + 1 + M, 2 * Wp - 1), :] = jnp.zeros(
        (2 * Wp - 1, Cout), yp_ref.dtype)

    # ------------------- stage 1: conv1 + BN1 + ReLU -----------------------
    # Accumulator initialized from the first tap's dot; tap dots kept adjacent
    # (no interleaved epilogue) so the MXU result path can accumulate.
    acc = jnp.dot(x_ref[0, pl.ds(0, M), :], w1_ref[0],
                  preferred_element_type=jnp.float32)
    for t in range(1, 9):
        ky, kx = divmod(t, 3)
        acc = acc + jnp.dot(x_ref[0, pl.ds(ky * Wp + kx, M), :], w1_ref[t],
                            preferred_element_type=jnp.float32)
    y1 = jnp.maximum(acc * s1_ref[...] + b1_ref[...], 0.0)   # single epilogue
    # Mask BEFORE the store: wrap columns must be exact 0.0 so the zero border
    # of yp stays valid for stage 2.
    y1 = jnp.where(valid, y1, 0.0)
    yp_ref[pl.ds(Wp + 1, M), :] = y1.astype(yp_ref.dtype)

    # ----------- stage 2: conv2 + BN2 + identity residual + ReLU -----------
    acc2 = jnp.dot(yp_ref[pl.ds(0, M), :], w2_ref[0],
                   preferred_element_type=jnp.float32)
    for t in range(1, 9):
        ky, kx = divmod(t, 3)
        acc2 = acc2 + jnp.dot(yp_ref[pl.ds(ky * Wp + kx, M), :], w2_ref[t],
                              preferred_element_type=jnp.float32)
    # Residual read from the (single) in-VMEM copy of x.  With mxu_dtype=bf16
    # the skip connection is added at bf16 input precision (documented).
    residual = x_ref[0, pl.ds(Wp + 1, M), :].astype(jnp.float32)
    out = jnp.maximum(acc2 * s2_ref[...] + b2_ref[...] + residual, 0.0)
    out_ref[0] = out.astype(out_ref.dtype)                    # one full store


def fold_bn(gamma, beta, mean, var, eps=1e-5):
    scale = gamma / jnp.sqrt(var + eps)
    bias = beta - mean * scale
    return scale.reshape(1, -1), bias.reshape(1, -1)


def oihw_to_taps(w_oihw):
    """PyTorch conv weight (Cout, Cin, 3, 3) -> (9, Cin, Cout) tap matrices."""
    w = jnp.transpose(w_oihw, (2, 3, 1, 0))  # (3, 3, Cin, Cout)
    return w.reshape(9, w.shape[2], w.shape[3])


@functools.partial(jax.jit, static_argnames=("mxu_dtype",))
def residual_block_forward(x_nchw, params, mxu_dtype=jnp.float32):
    """Pallas implementation of ResidualBlock.forward (shortcut=None, stride=1).

    mxu_dtype=jnp.bfloat16 is recommended on v5e, v6e and v7x for MXU peak
    (all MXUs are natively bf16; f32 matmuls are emulated with multiple
    passes).  Accumulation / BN / ReLU epilogue math stays in f32; the kernel
    output and HBM writeback are in mxu_dtype.
    """
    w1, s1, b1, w2, s2, b2 = params
    N, C, H, W = x_nchw.shape
    Cout = w1.shape[-1]
    assert C == Cout, "identity shortcut requires inchannel == outchannel"

    Wp = W + 2              # 1px zero halo left/right
    Hp = H + 3              # 1px halo top, 2 rows bottom so tap slices stay in-bounds
    L = Hp * Wp
    M = H * Wp

    # NCHW -> NHWC, zero pad, flatten spatial dims (one fused XLA pass).
    x = jnp.transpose(x_nchw, (0, 2, 3, 1))
    x_pad = jnp.pad(x, ((0, 0), (1, 2), (1, 1), (0, 0)))
    x_flat = x_pad.reshape(N, L, C).astype(mxu_dtype)

    w1 = w1.astype(mxu_dtype)
    w2 = w2.astype(mxu_dtype)

    kernel = functools.partial(_fused_resblock_kernel, H=H, W=W)
    out_wide = pl.pallas_call(
        kernel,
        out_shape=jax.ShapeDtypeStruct((N, M, Cout), mxu_dtype),
        grid=(N,),
        in_specs=[
            pl.BlockSpec((1, L, C), lambda n: (n, 0, 0)),
            pl.BlockSpec((9, C, Cout), lambda n: (0, 0, 0)),
            pl.BlockSpec((1, Cout), lambda n: (0, 0)),
            pl.BlockSpec((1, Cout), lambda n: (0, 0)),
            pl.BlockSpec((9, Cout, Cout), lambda n: (0, 0, 0)),
            pl.BlockSpec((1, Cout), lambda n: (0, 0)),
            pl.BlockSpec((1, Cout), lambda n: (0, 0)),
        ],
        out_specs=pl.BlockSpec((1, M, Cout), lambda n: (n, 0, 0)),
        scratch_shapes=[pltpu.VMEM((L, Cout), mxu_dtype)],
        compiler_params=pltpu.CompilerParams(
            dimension_semantics=("parallel",),
            vmem_limit_bytes=64 * 1024 * 1024),
    )(x_flat, w1, s1, b1, w2, s2, b2)

    # (N, M, C) wide -> (N, H, W, C) valid -> NCHW.  Slice fuses with transpose.
    out = out_wide.reshape(N, H, Wp, Cout)[:, :, :W, :]
    return jnp.transpose(out, (0, 3, 1, 2))


# ---------------------------------------------------------------------------
# Pure-JAX reference (for correctness check against the Pallas kernel).
# ---------------------------------------------------------------------------
def _ref_conv_nchw(x_nchw, w_oihw):
    return jax.lax.conv_general_dilated(
        x_nchw, w_oihw, window_strides=(1, 1), padding=((1, 1), (1, 1)),
        dimension_numbers=("NCHW", "OIHW", "NCHW"))


def _ref_forward(x_nchw, raw):
    (w1_oihw, g1, be1, m1, v1, w2_oihw, g2, be2, m2, v2) = raw
    eps = 1e-5

    def bn(y, g, b, m, v):
        return (y - m[None, :, None, None]) / jnp.sqrt(v[None, :, None, None] + eps) \
            * g[None, :, None, None] + b[None, :, None, None]

    y = _ref_conv_nchw(x_nchw, w1_oihw)
    y = jnp.maximum(bn(y, g1, be1, m1, v1), 0.0)
    y = _ref_conv_nchw(y, w2_oihw)
    y = bn(y, g2, be2, m2, v2)
    return jnp.maximum(y + x_nchw, 0.0)


if __name__ == "__main__":
    # Small shapes: batch=2, inchannel=outchannel=8, spatial 8x8
    N, C, H, W = 2, 8, 8, 8
    key = jax.random.PRNGKey(0)
    ks = jax.random.split(key, 12)

    x = jax.random.normal(ks[0], (N, C, H, W), jnp.float32)

    # Deterministic synthetic parameters (PyTorch shapes).
    w1_oihw = 0.1 * jax.random.normal(ks[1], (C, C, 3, 3), jnp.float32)
    g1 = 1.0 + 0.1 * jax.random.normal(ks[2], (C,), jnp.float32)
    be1 = 0.1 * jax.random.normal(ks[3], (C,), jnp.float32)
    m1 = 0.05 * jax.random.normal(ks[4], (C,), jnp.float32)
    v1 = 0.5 + jnp.abs(jax.random.normal(ks[5], (C,), jnp.float32))

    w2_oihw = 0.1 * jax.random.normal(ks[6], (C, C, 3, 3), jnp.float32)
    g2 = 1.0 + 0.1 * jax.random.normal(ks[7], (C,), jnp.float32)
    be2 = 0.1 * jax.random.normal(ks[8], (C,), jnp.float32)
    m2 = 0.05 * jax.random.normal(ks[9], (C,), jnp.float32)
    v2 = 0.5 + jnp.abs(jax.random.normal(ks[10], (C,), jnp.float32))

    # Fold BN running stats into per-channel scale/bias (eval-mode BatchNorm).
    s1, b1 = fold_bn(g1, be1, m1, v1)
    s2, b2 = fold_bn(g2, be2, m2, v2)
    params = (oihw_to_taps(w1_oihw), s1, b1, oihw_to_taps(w2_oihw), s2, b2)

    out = residual_block_forward(x, params)
    out = jax.block_until_ready(out)

    ref = _ref_forward(x, (w1_oihw, g1, be1, m1, v1, w2_oihw, g2, be2, m2, v2))
    assert out.shape == (N, C, H, W)
    assert jnp.allclose(out, ref, atol=1e-4, rtol=1e-4), \
        f"max abs err {jnp.max(jnp.abs(out - ref))}"

    print("KERNEL_OK")
</pallas_src>

<mosaic_0001>
module attributes {stable_mosaic.version = 11 : i64} {
  func.func @_fused_resblock_kernel(%arg0: i32, %arg1: memref<1x110x8xf32, #tpu.memory_space<vmem>>, %arg2: memref<9x8x8xf32, #tpu.memory_space<vmem>>, %arg3: memref<1x8xf32, #tpu.memory_space<vmem>>, %arg4: memref<1x8xf32, #tpu.memory_space<vmem>>, %arg5: memref<9x8x8xf32, #tpu.memory_space<vmem>>, %arg6: memref<1x8xf32, #tpu.memory_space<vmem>>, %arg7: memref<1x8xf32, #tpu.memory_space<vmem>>, %arg8: memref<1x80x8xf32, #tpu.memory_space<vmem>>, %arg9: memref<110x8xf32, #tpu.memory_space<vmem>>) attributes {dimension_semantics = [#tpu.dimension_semantics<parallel>], iteration_bounds = array<i64: 2>, scalar_prefetch = 0 : i64, scratch_operands = 1 : i64, tpu.core_type = #tpu.core_type<tc>, window_params = [{transform_indices = @transform_0, window_bounds = array<i64: 1, 110, 8>}, {pipeline_mode = #tpu.pipeline_mode<synchronous>, transform_indices = @transform_1, window_bounds = array<i64: 9, 8, 8>}, {pipeline_mode = #tpu.pipeline_mode<synchronous>, transform_indices = @transform_2, window_bounds = array<i64: 1, 8>}, {pipeline_mode = #tpu.pipeline_mode<synchronous>, transform_indices = @transform_3, window_bounds = array<i64: 1, 8>}, {pipeline_mode = #tpu.pipeline_mode<synchronous>, transform_indices = @transform_4, window_bounds = array<i64: 9, 8, 8>}, {pipeline_mode = #tpu.pipeline_mode<synchronous>, transform_indices = @transform_5, window_bounds = array<i64: 1, 8>}, {pipeline_mode = #tpu.pipeline_mode<synchronous>, transform_indices = @transform_6, window_bounds = array<i64: 1, 8>}, {transform_indices = @transform_7, window_bounds = array<i64: 1, 80, 8>}]} {
    %0 = tpu.iota {dimensions = array<i32: 0>} : vector<80x8xi32>
    %c10_i32 = arith.constant 10 : i32
    %c0_i32 = arith.constant 0 : i32
    %1 = arith.cmpi eq, %c10_i32, %c0_i32 : i32
    %c1_i32 = arith.constant 1 : i32
    %2 = arith.select %1, %c1_i32, %c10_i32 : i32
    %3 = vector.broadcast %2 : i32 to vector<80x8xi32>
    %4 = arith.remsi %0, %3 : vector<80x8xi32>
    %c0_i32_0 = arith.constant 0 : i32
    %5 = vector.broadcast %c0_i32_0 : i32 to vector<80x8xi32>
    %6 = arith.cmpi ne, %4, %5 : vector<80x8xi32>
    %c0_i32_1 = arith.constant 0 : i32
    %7 = vector.broadcast %c0_i32_1 : i32 to vector<80x8xi32>
    %8 = arith.cmpi slt, %4, %7 : vector<80x8xi32>
    %c0_i32_2 = arith.constant 0 : i32
    %9 = arith.cmpi slt, %2, %c0_i32_2 : i32
    %10 = vector.broadcast %9 : i1 to vector<80x8xi1>
    %11 = vector.broadcast %10 : vector<80x8xi1> to vector<80x8xi1>
    %12 = arith.xori %8, %11 : vector<80x8xi1>
    %13 = arith.andi %12, %6 : vector<80x8xi1>
    %14 = vector.broadcast %2 : i32 to vector<80x8xi32>
    %15 = arith.addi %4, %14 : vector<80x8xi32>
    %16 = arith.select %13, %15, %4 : vector<80x8xi1>, vector<80x8xi32>
    %c8_i32 = arith.constant 8 : i32
    %17 = vector.broadcast %c8_i32 : i32 to vector<80x8xi32>
    %18 = arith.cmpi slt, %16, %17 : vector<80x8xi32>
    %cst = arith.constant 0.000000e+00 : f32
    %19 = vector.broadcast %cst : f32 to vector<11x8xf32>
    %c0 = arith.constant 0 : index
    %c0_3 = arith.constant 0 : index
    %20 = vector.load %arg9[%c0, %c0_3] : memref<110x8xf32, #tpu.memory_space<vmem>>, vector<11x8xf32>
    tpu.vector_store %arg9[%c0, %c0_3], %19 {strides = array<i32>} : memref<110x8xf32, #tpu.memory_space<vmem>>, vector<11x8xf32>,
    %cst_4 = arith.constant 0.000000e+00 : f32
    %21 = vector.broadcast %cst_4 : f32 to vector<19x8xf32>
    %c91 = arith.constant 91 : index
    %c0_5 = arith.constant 0 : index
    %22 = vector.load %arg9[%c91, %c0_5] : memref<110x8xf32, #tpu.memory_space<vmem>>, vector<19x8xf32>
    tpu.vector_store %arg9[%c91, %c0_5], %21 {strides = array<i32>} : memref<110x8xf32, #tpu.memory_space<vmem>>, vector<19x8xf32>,
    %c0_6 = arith.constant 0 : index
    %c0_7 = arith.constant 0 : index
    %c0_8 = arith.constant 0 : index
    %23 = vector.load %arg1[%c0_6, %c0_7, %c0_8] : memref<1x110x8xf32, #tpu.memory_space<vmem>>, vector<1x80x8xf32>
    %24 = vector.shape_cast %23 : vector<1x80x8xf32> to vector<80x8xf32>
    %c0_9 = arith.constant 0 : index
    %c0_10 = arith.constant 0 : index
    %c0_11 = arith.constant 0 : index
    %25 = vector.load %arg2[%c0_9, %c0_10, %c0_11] : memref<9x8x8xf32, #tpu.memory_space<vmem>>, vector<1x8x8xf32>
    %26 = vector.shape_cast %25 : vector<1x8x8xf32> to vector<8x8xf32>
    %cst_12 = arith.constant dense<0.000000e+00> : vector<80x8xf32>
    %27 = tpu.matmul %24, %26, %cst_12 {dimension_numbers = #tpu.dot_dimension_numbers<[1], [0], [0], [1], [0, 0, 1, 1], [], []>} : vector<80x8xf32>, vector<8x8xf32>, vector<80x8xf32> -> vector<80x8xf32>
    %c0_13 = arith.constant 0 : index
    %c1 = arith.constant 1 : index
    %c0_14 = arith.constant 0 : index
    %28 = vector.load %arg1[%c0_13, %c1, %c0_14] : memref<1x110x8xf32, #tpu.memory_space<vmem>>, vector<1x80x8xf32>
    %29 = vector.shape_cast %28 : vector<1x80x8xf32> to vector<80x8xf32>
    %c1_15 = arith.constant 1 : index
    %c0_16 = arith.constant 0 : index
    %c0_17 = arith.constant 0 : index
    %30 = vector.load %arg2[%c1_15, %c0_16, %c0_17] : memref<9x8x8xf32, #tpu.memory_space<vmem>>, vector<1x8x8xf32>
    %31 = vector.shape_cast %30 : vector<1x8x8xf32> to vector<8x8xf32>
    %cst_18 = arith.constant dense<0.000000e+00> : vector<80x8xf32>
    %32 = tpu.matmul %29, %31, %cst_18 {dimension_numbers = #tpu.dot_dimension_numbers<[1], [0], [0], [1], [0, 0, 1, 1], [], []>} : vector<80x8xf32>, vector<8x8xf32>, vector<80x8xf32> -> vector<80x8xf32>
    %33 = arith.addf %27, %32 : vector<80x8xf32>
    %c0_19 = arith.constant 0 : index
    %c2 = arith.constant 2 : index
    %c0_20 = arith.constant 0 : index
    %34 = vector.load %arg1[%c0_19, %c2, %c0_20] : memref<1x110x8xf32, #tpu.memory_space<vmem>>, vector<1x80x8xf32>
    %35 = vector.shape_cast %34 : vector<1x80x8xf32> to vector<80x8xf32>
    %c2_21 = arith.constant 2 : index
    %c0_22 = arith.constant 0 : index
    %c0_23 = arith.constant 0 : index
    %36 = vector.load %arg2[%c2_21, %c0_22, %c0_23] : memref<9x8x8xf32, #tpu.memory_space<vmem>>, vector<1x8x8xf32>
    %37 = vector.shape_cast %36 : vector<1x8x8xf32> to vector<8x8xf32>
    %cst_24 = arith.constant dense<0.000000e+00> : vector<80x8xf32>
    %38 = tpu.matmul %35, %37, %cst_24 {dimension_numbers = #tpu.dot_dimension_numbers<[1], [0], [0], [1], [0, 0, 1, 1], [], []>} : vector<80x8xf32>, vector<8x8xf32>, vector<80x8xf32> -> vector<80x8xf32>
    %39 = arith.addf %33, %38 : vector<80x8xf32>
    %c0_25 = arith.constant 0 : index
    %c10 = arith.constant 10 : index
    %c0_26 = arith.constant 0 : index
    %40 = vector.load %arg1[%c0_25, %c10, %c0_26] : memref<1x110x8xf32, #tpu.memory_space<vmem>>, vector<1x80x8xf32>
    %41 = vector.shape_cast %40 : vector<1x80x8xf32> to vector<80x8xf32>
    %c3 = arith.constant 3 : index
    %c0_27 = arith.constant 0 : index
    %c0_28 = arith.constant 0 : index
    %42 = vector.load %arg2[%c3, %c0_27, %c0_28] : memref<9x8x8xf32, #tpu.memory_space<vmem>>, vector<1x8x8xf32>
    %43 = vector.shape_cast %42 : vector<1x8x8xf32> to vector<8x8xf32>
    %cst_29 = arith.constant dense<0.000000e+00> : vector<80x8xf32>
    %44 = tpu.matmul %41, %43, %cst_29 {dimension_numbers = #tpu.dot_dimension_numbers<[1], [0], [0], [1], [0, 0, 1, 1], [], []>} : vector<80x8xf32>, vector<8x8xf32>, vector<80x8xf32> -> vector<80x8xf32>
    %45 = arith.addf %39, %44 : vector<80x8xf32>
    %c0_30 = arith.constant 0 : index
    %c11 = arith.constant 11 : index
    %c0_31 = arith.constant 0 : index
    %46 = vector.load %arg1[%c0_30, %c11, %c0_31] : memref<1x110x8xf32, #tpu.memory_space<vmem>>, vector<1x80x8xf32>
    %47 = vector.shape_cast %46 : vector<1x80x8xf32> to vector<80x8xf32>
    %c4 = arith.constant 4 : index
    %c0_32 = arith.constant 0 : index
    %c0_33 = arith.constant 0 : index
    %48 = vector.load %arg2[%c4, %c0_32, %c0_33] : memref<9x8x8xf32, #tpu.memory_space<vmem>>, vector<1x8x8xf32>
    %49 = vector.shape_cast %48 : vector<1x8x8xf32> to vector<8x8xf32>
    %cst_34 = arith.constant dense<0.000000e+00> : vector<80x8xf32>
    %50 = tpu.matmul %47, %49, %cst_34 {dimension_numbers = #tpu.dot_dimension_numbers<[1], [0], [0], [1], [0, 0, 1, 1], [], []>} : vector<80x8xf32>, vector<8x8xf32>, vector<80x8xf32> -> vector<80x8xf32>
    %51 = arith.addf %45, %50 : vector<80x8xf32>
    %c0_35 = arith.constant 0 : index
    %c12 = arith.constant 12 : index
    %c0_36 = arith.constant 0 : index
    %52 = vector.load %arg1[%c0_35, %c12, %c0_36] : memref<1x110x8xf32, #tpu.memory_space<vmem>>, vector<1x80x8xf32>
    %53 = vector.shape_cast %52 : vector<1x80x8xf32> to vector<80x8xf32>
    %c5 = arith.constant 5 : index
    %c0_37 = arith.constant 0 : index
    %c0_38 = arith.constant 0 : index
    %54 = vector.load %arg2[%c5, %c0_37, %c0_38] : memref<9x8x8xf32, #tpu.memory_space<vmem>>, vector<1x8x8xf32>
    %55 = vector.shape_cast %54 : vector<1x8x8xf32> to vector<8x8xf32>
    %cst_39 = arith.constant dense<0.000000e+00> : vector<80x8xf32>
    %56 = tpu.matmul %53, %55, %cst_39 {dimension_numbers = #tpu.dot_dimension_numbers<[1], [0], [0], [1], [0, 0, 1, 1], [], []>} : vector<80x8xf32>, vector<8x8xf32>, vector<80x8xf32> -> vector<80x8xf32>
    %57 = arith.addf %51, %56 : vector<80x8xf32>
    %c0_40 = arith.constant 0 : index
    %c20 = arith.constant 20 : index
    %c0_41 = arith.constant 0 : index
    %58 = vector.load %arg1[%c0_40, %c20, %c0_41] : memref<1x110x8xf32, #tpu.memory_space<vmem>>, vector<1x80x8xf32>
    %59 = vector.shape_cast %58 : vector<1x80x8xf32> to vector<80x8xf32>
    %c6 = arith.constant 6 : index
    %c0_42 = arith.constant 0 : index
    %c0_43 = arith.constant 0 : index
    %60 = vector.load %arg2[%c6, %c0_42, %c0_43] : memref<9x8x8xf32, #tpu.memory_space<vmem>>, vector<1x8x8xf32>
    %61 = vector.shape_cast %60 : vector<1x8x8xf32> to vector<8x8xf32>
    %cst_44 = arith.constant dense<0.000000e+00> : vector<80x8xf32>
    %62 = tpu.matmul %59, %61, %cst_44 {dimension_numbers = #tpu.dot_dimension_numbers<[1], [0], [0], [1], [0, 0, 1, 1], [], []>} : vector<80x8xf32>, vector<8x8xf32>, vector<80x8xf32> -> vector<80x8xf32>
    %63 = arith.addf %57, %62 : vector<80x8xf32>
    %c0_45 = arith.constant 0 : index
    %c21 = arith.constant 21 : index
    %c0_46 = arith.constant 0 : index
    %64 = vector.load %arg1[%c0_45, %c21, %c0_46] : memref<1x110x8xf32, #tpu.memory_space<vmem>>, vector<1x80x8xf32>
    %65 = vector.shape_cast %64 : vector<1x80x8xf32> to vector<80x8xf32>
    %c7 = arith.constant 7 : index
    %c0_47 = arith.constant 0 : index
    %c0_48 = arith.constant 0 : index
    %66 = vector.load %arg2[%c7, %c0_47, %c0_48] : memref<9x8x8xf32, #tpu.memory_space<vmem>>, vector<1x8x8xf32>
    %67 = vector.shape_cast %66 : vector<1x8x8xf32> to vector<8x8xf32>
    %cst_49 = arith.constant dense<0.000000e+00> : vector<80x8xf32>
    %68 = tpu.matmul %65, %67, %cst_49 {dimension_numbers = #tpu.dot_dimension_numbers<[1], [0], [0], [1], [0, 0, 1, 1], [], []>} : vector<80x8xf32>, vector<8x8xf32>, vector<80x8xf32> -> vector<80x8xf32>
    %69 = arith.addf %63, %68 : vector<80x8xf32>
    %c0_50 = arith.constant 0 : index
    %c22 = arith.constant 22 : index
    %c0_51 = arith.constant 0 : index
    %70 = vector.load %arg1[%c0_50, %c22, %c0_51] : memref<1x110x8xf32, #tpu.memory_space<vmem>>, vector<1x80x8xf32>
    %71 = vector.shape_cast %70 : vector<1x80x8xf32> to vector<80x8xf32>
    %c8 = arith.constant 8 : index
    %c0_52 = arith.constant 0 : index
    %c0_53 = arith.constant 0 : index
    %72 = vector.load %arg2[%c8, %c0_52, %c0_53] : memref<9x8x8xf32, #tpu.memory_space<vmem>>, vector<1x8x8xf32>
    %73 = vector.shape_cast %72 : vector<1x8x8xf32> to vector<8x8xf32>
    %cst_54 = arith.constant dense<0.000000e+00> : vector<80x8xf32>
    %74 = tpu.matmul %71, %73, %cst_54 {dimension_numbers = #tpu.dot_dimension_numbers<[1], [0], [0], [1], [0, 0, 1, 1], [], []>} : vector<80x8xf32>, vector<8x8xf32>, vector<80x8xf32> -> vector<80x8xf32>
    %75 = arith.addf %69, %74 : vector<80x8xf32>
    %c0_55 = arith.constant 0 : index
    %c0_56 = arith.constant 0 : index
    %76 = vector.load %arg3[%c0_55, %c0_56] : memref<1x8xf32, #tpu.memory_space<vmem>>, vector<1x8xf32>
    %77 = vector.broadcast %76 : vector<1x8xf32> to vector<80x8xf32>
    %78 = arith.mulf %75, %77 : vector<80x8xf32>
    %c0_57 = arith.constant 0 : index
    %c0_58 = arith.constant 0 : index
    %79 = vector.load %arg4[%c0_57, %c0_58] : memref<1x8xf32, #tpu.memory_space<vmem>>, vector<1x8xf32>
    %80 = vector.broadcast %79 : vector<1x8xf32> to vector<80x8xf32>
    %81 = arith.addf %78, %80 : vector<80x8xf32>
    %cst_59 = arith.constant 0.000000e+00 : f32
    %82 = vector.broadcast %cst_59 : f32 to vector<80x8xf32>
    %83 = arith.maximumf %81, %82 : vector<80x8xf32>
    %cst_60 = arith.constant 0.000000e+00 : f32
    %84 = vector.broadcast %cst_60 : f32 to vector<80x8xf32>
    %85 = arith.select %18, %83, %84 : vector<80x8xi1>, vector<80x8xf32>
    %c11_61 = arith.constant 11 : index
    %c0_62 = arith.constant 0 : index
    %86 = vector.load %arg9[%c11_61, %c0_62] : memref<110x8xf32, #tpu.memory_space<vmem>>, vector<80x8xf32>
    tpu.vector_store %arg9[%c11_61, %c0_62], %85 {strides = array<i32>} : memref<110x8xf32, #tpu.memory_space<vmem>>, vector<80x8xf32>,
    %c0_63 = arith.constant 0 : index
    %c0_64 = arith.constant 0 : index
    %87 = vector.load %arg9[%c0_63, %c0_64] : memref<110x8xf32, #tpu.memory_space<vmem>>, vector<80x8xf32>
    %c0_65 = arith.constant 0 : index
    %c0_66 = arith.constant 0 : index
    %c0_67 = arith.constant 0 : index
    %88 = vector.load %arg5[%c0_65, %c0_66, %c0_67] : memref<9x8x8xf32, #tpu.memory_space<vmem>>, vector<1x8x8xf32>
    %89 = vector.shape_cast %88 : vector<1x8x8xf32> to vector<8x8xf32>
    %cst_68 = arith.constant dense<0.000000e+00> : vector<80x8xf32>
    %90 = tpu.matmul %87, %89, %cst_68 {dimension_numbers = #tpu.dot_dimension_numbers<[1], [0], [0], [1], [0, 0, 1, 1], [], []>} : vector<80x8xf32>, vector<8x8xf32>, vector<80x8xf32> -> vector<80x8xf32>
    %c1_69 = arith.constant 1 : index
    %c0_70 = arith.constant 0 : index
    %91 = vector.load %arg9[%c1_69, %c0_70] : memref<110x8xf32, #tpu.memory_space<vmem>>, vector<80x8xf32>
    %c1_71 = arith.constant 1 : index
    %c0_72 = arith.constant 0 : index
    %c0_73 = arith.constant 0 : index
    %92 = vector.load %arg5[%c1_71, %c0_72, %c0_73] : memref<9x8x8xf32, #tpu.memory_space<vmem>>, vector<1x8x8xf32>
    %93 = vector.shape_cast %92 : vector<1x8x8xf32> to vector<8x8xf32>
    %cst_74 = arith.constant dense<0.000000e+00> : vector<80x8xf32>
    %94 = tpu.matmul %91, %93, %cst_74 {dimension_numbers = #tpu.dot_dimension_numbers<[1], [0], [0], [1], [0, 0, 1, 1], [], []>} : vector<80x8xf32>, vector<8x8xf32>, vector<80x8xf32> -> vector<80x8xf32>
    %95 = arith.addf %90, %94 : vector<80x8xf32>
    %c2_75 = arith.constant 2 : index
    %c0_76 = arith.constant 0 : index
    %96 = vector.load %arg9[%c2_75, %c0_76] : memref<110x8xf32, #tpu.memory_space<vmem>>, vector<80x8xf32>
    %c2_77 = arith.constant 2 : index
    %c0_78 = arith.constant 0 : index
    %c0_79 = arith.constant 0 : index
    %97 = vector.load %arg5[%c2_77, %c0_78, %c0_79] : memref<9x8x8xf32, #tpu.memory_space<vmem>>, vector<1x8x8xf32>
    %98 = vector.shape_cast %97 : vector<1x8x8xf32> to vector<8x8xf32>
    %cst_80 = arith.constant dense<0.000000e+00> : vector<80x8xf32>
    %99 = tpu.matmul %96, %98, %cst_80 {dimension_numbers = #tpu.dot_dimension_numbers<[1], [0], [0], [1], [0, 0, 1, 1], [], []>} : vector<80x8xf32>, vector<8x8xf32>, vector<80x8xf32> -> vector<80x8xf32>
    %100 = arith.addf %95, %99 : vector<80x8xf32>
    %c10_81 = arith.constant 10 : index
    %c0_82 = arith.constant 0 : index
    %101 = vector.load %arg9[%c10_81, %c0_82] : memref<110x8xf32, #tpu.memory_space<vmem>>, vector<80x8xf32>
    %c3_83 = arith.constant 3 : index
    %c0_84 = arith.constant 0 : index
    %c0_85 = arith.constant 0 : index
    %102 = vector.load %arg5[%c3_83, %c0_84, %c0_85] : memref<9x8x8xf32, #tpu.memory_space<vmem>>, vector<1x8x8xf32>
    %103 = vector.shape_cast %102 : vector<1x8x8xf32> to vector<8x8xf32>
    %cst_86 = arith.constant dense<0.000000e+00> : vector<80x8xf32>
    %104 = tpu.matmul %101, %103, %cst_86 {dimension_numbers = #tpu.dot_dimension_numbers<[1], [0], [0], [1], [0, 0, 1, 1], [], []>} : vector<80x8xf32>, vector<8x8xf32>, vector<80x8xf32> -> vector<80x8xf32>
    %105 = arith.addf %100, %104 : vector<80x8xf32>
    %c11_87 = arith.constant 11 : index
    %c0_88 = arith.constant 0 : index
    %106 = vector.load %arg9[%c11_87, %c0_88] : memref<110x8xf32, #tpu.memory_space<vmem>>, vector<80x8xf32>
    %c4_89 = arith.constant 4 : index
    %c0_90 = arith.constant 0 : index
    %c0_91 = arith.constant 0 : index
    %107 = vector.load %arg5[%c4_89, %c0_90, %c0_91] : memref<9x8x8xf32, #tpu.memory_space<vmem>>, vector<1x8x8xf32>
    %108 = vector.shape_cast %107 : vector<1x8x8xf32> to vector<8x8xf32>
    %cst_92 = arith.constant dense<0.000000e+00> : vector<80x8xf32>
    %109 = tpu.matmul %106, %108, %cst_92 {dimension_numbers = #tpu.dot_dimension_numbers<[1], [0], [0], [1], [0, 0, 1, 1], [], []>} : vector<80x8xf32>, vector<8x8xf32>, vector<80x8xf32> -> vector<80x8xf32>
    %110 = arith.addf %105, %109 : vector<80x8xf32>
    %c12_93 = arith.constant 12 : index
    %c0_94 = arith.constant 0 : index
    %111 = vector.load %arg9[%c12_93, %c0_94] : memref<110x8xf32, #tpu.memory_space<vmem>>, vector<80x8xf32>
    %c5_95 = arith.constant 5 : index
    %c0_96 = arith.constant 0 : index
    %c0_97 = arith.constant 0 : index
    %112 = vector.load %arg5[%c5_95, %c0_96, %c0_97] : memref<9x8x8xf32, #tpu.memory_space<vmem>>, vector<1x8x8xf32>
    %113 = vector.shape_cast %112 : vector<1x8x8xf32> to vector<8x8xf32>
    %cst_98 = arith.constant dense<0.000000e+00> : vector<80x8xf32>
    %114 = tpu.matmul %111, %113, %cst_98 {dimension_numbers = #tpu.dot_dimension_numbers<[1], [0], [0], [1], [0, 0, 1, 1], [], []>} : vector<80x8xf32>, vector<8x8xf32>, vector<80x8xf32> -> vector<80x8xf32>
    %115 = arith.addf %110, %114 : vector<80x8xf32>
    %c20_99 = arith.constant 20 : index
    %c0_100 = arith.constant 0 : index
    %116 = vector.load %arg9[%c20_99, %c0_100] : memref<110x8xf32, #tpu.memory_space<vmem>>, vector<80x8xf32>
    %c6_101 = arith.constant 6 : index
    %c0_102 = arith.constant 0 : index
    %c0_103 = arith.constant 0 : index
    %117 = vector.load %arg5[%c6_101, %c0_102, %c0_103] : memref<9x8x8xf32, #tpu.memory_space<vmem>>, vector<1x8x8xf32>
    %118 = vector.shape_cast %117 : vector<1x8x8xf32> to vector<8x8xf32>
    %cst_104 = arith.constant dense<0.000000e+00> : vector<80x8xf32>
    %119 = tpu.matmul %116, %118, %cst_104 {dimension_numbers = #tpu.dot_dimension_numbers<[1], [0], [0], [1], [0, 0, 1, 1], [], []>} : vector<80x8xf32>, vector<8x8xf32>, vector<80x8xf32> -> vector<80x8xf32>
    %120 = arith.addf %115, %119 : vector<80x8xf32>
    %c21_105 = arith.constant 21 : index
    %c0_106 = arith.constant 0 : index
    %121 = vector.load %arg9[%c21_105, %c0_106] : memref<110x8xf32, #tpu.memory_space<vmem>>, vector<80x8xf32>
    %c7_107 = arith.constant 7 : index
    %c0_108 = arith.constant 0 : index
    %c0_109 = arith.constant 0 : index
    %122 = vector.load %arg5[%c7_107, %c0_108, %c0_109] : memref<9x8x8xf32, #tpu.memory_space<vmem>>, vector<1x8x8xf32>
    %123 = vector.shape_cast %122 : vector<1x8x8xf32> to vector<8x8xf32>
    %cst_110 = arith.constant dense<0.000000e+00> : vector<80x8xf32>
    %124 = tpu.matmul %121, %123, %cst_110 {dimension_numbers = #tpu.dot_dimension_numbers<[1], [0], [0], [1], [0, 0, 1, 1], [], []>} : vector<80x8xf32>, vector<8x8xf32>, vector<80x8xf32> -> vector<80x8xf32>
    %125 = arith.addf %120, %124 : vector<80x8xf32>
    %c22_111 = arith.constant 22 : index
    %c0_112 = arith.constant 0 : index
    %126 = vector.load %arg9[%c22_111, %c0_112] : memref<110x8xf32, #tpu.memory_space<vmem>>, vector<80x8xf32>
    %c8_113 = arith.constant 8 : index
    %c0_114 = arith.constant 0 : index
    %c0_115 = arith.constant 0 : index
    %127 = vector.load %arg5[%c8_113, %c0_114, %c0_115] : memref<9x8x8xf32, #tpu.memory_space<vmem>>, vector<1x8x8xf32>
    %128 = vector.shape_cast %127 : vector<1x8x8xf32> to vector<8x8xf32>
    %cst_116 = arith.constant dense<0.000000e+00> : vector<80x8xf32>
    %129 = tpu.matmul %126, %128, %cst_116 {dimension_numbers = #tpu.dot_dimension_numbers<[1], [0], [0], [1], [0, 0, 1, 1], [], []>} : vector<80x8xf32>, vector<8x8xf32>, vector<80x8xf32> -> vector<80x8xf32>
    %130 = arith.addf %125, %129 : vector<80x8xf32>
    %c0_117 = arith.constant 0 : index
    %c11_118 = arith.constant 11 : index
    %c0_119 = arith.constant 0 : index
    %131 = vector.load %arg1[%c0_117, %c11_118, %c0_119] : memref<1x110x8xf32, #tpu.memory_space<vmem>>, vector<1x80x8xf32>
    %132 = vector.shape_cast %131 : vector<1x80x8xf32> to vector<80x8xf32>
    %c0_120 = arith.constant 0 : index
    %c0_121 = arith.constant 0 : index
    %133 = vector.load %arg6[%c0_120, %c0_121] : memref<1x8xf32, #tpu.memory_space<vmem>>, vector<1x8xf32>
    %134 = vector.broadcast %133 : vector<1x8xf32> to vector<80x8xf32>
    %135 = arith.mulf %130, %134 : vector<80x8xf32>
    %c0_122 = arith.constant 0 : index
    %c0_123 = arith.constant 0 : index
    %136 = vector.load %arg7[%c0_122, %c0_123] : memref<1x8xf32, #tpu.memory_space<vmem>>, vector<1x8xf32>
    %137 = vector.broadcast %136 : vector<1x8xf32> to vector<80x8xf32>
    %138 = arith.addf %135, %137 : vector<80x8xf32>
    %139 = arith.addf %138, %132 : vector<80x8xf32>
    %cst_124 = arith.constant 0.000000e+00 : f32
    %140 = vector.broadcast %cst_124 : f32 to vector<80x8xf32>
    %141 = arith.maximumf %139, %140 : vector<80x8xf32>
    %c0_125 = arith.constant 0 : index
    %c0_126 = arith.constant 0 : index
    %c0_127 = arith.constant 0 : index
    %142 = vector.load %arg8[%c0_125, %c0_126, %c0_127] : memref<1x80x8xf32, #tpu.memory_space<vmem>>, vector<1x80x8xf32>
    %143 = vector.shape_cast %142 : vector<1x80x8xf32> to vector<80x8xf32>
    %144 = vector.shape_cast %141 : vector<80x8xf32> to vector<1x80x8xf32>
    tpu.vector_store %arg8[%c0_125, %c0_126, %c0_127], %144 {strides = array<i32>} : memref<1x80x8xf32, #tpu.memory_space<vmem>>, vector<1x80x8xf32>,
    return
  }
  func.func @transform_0(%arg0: i32) -> (i32, i32, i32) {
    %c0_i32 = arith.constant 0 : i32
    %c0_i32_0 = arith.constant 0 : i32
    %c0_i32_1 = arith.constant 0 : i32
    return %arg0, %c0_i32, %c0_i32_0 : i32, i32, i32
  }
  func.func @transform_1(%arg0: i32) -> (i32, i32, i32) {
    %c0_i32 = arith.constant 0 : i32
    %c0_i32_0 = arith.constant 0 : i32
    %c0_i32_1 = arith.constant 0 : i32
    %c0_i32_2 = arith.constant 0 : i32
    return %c0_i32, %c0_i32_0, %c0_i32_1 : i32, i32, i32
  }
  func.func @transform_2(%arg0: i32) -> (i32, i32) {
    %c0_i32 = arith.constant 0 : i32
    %c0_i32_0 = arith.constant 0 : i32
    %c0_i32_1 = arith.constant 0 : i32
    return %c0_i32, %c0_i32_0 : i32, i32
  }
  func.func @transform_3(%arg0: i32) -> (i32, i32) {
    %c0_i32 = arith.constant 0 : i32
    %c0_i32_0 = arith.constant 0 : i32
    %c0_i32_1 = arith.constant 0 : i32
    return %c0_i32, %c0_i32_0 : i32, i32
  }
  func.func @transform_4(%arg0: i32) -> (i32, i32, i32) {
    %c0_i32 = arith.constant 0 : i32
    %c0_i32_0 = arith.constant 0 : i32
    %c0_i32_1 = arith.constant 0 : i32
    %c0_i32_2 = arith.constant 0 : i32
    return %c0_i32, %c0_i32_0, %c0_i32_1 : i32, i32, i32
  }
  func.func @transform_5(%arg0: i32) -> (i32, i32) {
    %c0_i32 = arith.constant 0 : i32
    %c0_i32_0 = arith.constant 0 : i32
    %c0_i32_1 = arith.constant 0 : i32
    return %c0_i32, %c0_i32_0 : i32, i32
  }
  func.func @transform_6(%arg0: i32) -> (i32, i32) {
    %c0_i32 = arith.constant 0 : i32
    %c0_i32_0 = arith.constant 0 : i32
    %c0_i32_1 = arith.constant 0 : i32
    return %c0_i32, %c0_i32_0 : i32, i32
  }
  func.func @transform_7(%arg0: i32) -> (i32, i32, i32) {
    %c0_i32 = arith.constant 0 : i32
    %c0_i32_0 = arith.constant 0 : i32
    %c0_i32_1 = arith.constant 0 : i32
    return %arg0, %c0_i32, %c0_i32_0 : i32, i32, i32
  }
}

</mosaic_0001>

<llo_original>
// kernel: residual_block_forward.1
$region0: #{residual_block_forward.1}
  #allocation0 [shape = 'u32[]', space=smem, size = 0x4, offset = 0x4, fixed_abs, tag = 'smem constant byte address 0x4 - core index']
  #allocation1 [shape = 'u32[72,128]{1,0:T(1,128)}', space=vmem, size = 0x9000, scoped, tag = 'internal scratch']
  #allocation2 [shape = 'f32[110,8]{1,0:T(8,128)}', space=vmem, size = 0xe000, scoped, tag = 'scratch operand']
  %s0 = inlined_call_operand.vmem [shape: f32[2,110,8], index: 0, kind: input, shape index: {}]
  %s1 = inlined_call_operand.vmem [shape: f32[9,8,8], index: 1, kind: input, shape index: {}]
  %s2 = inlined_call_operand.vmem [shape: f32[1,8], index: 2, kind: input, shape index: {}]
  %s3 = inlined_call_operand.vmem [shape: f32[1,8], index: 3, kind: input, shape index: {}]
  %s4 = inlined_call_operand.vmem [shape: f32[9,8,8], index: 4, kind: input, shape index: {}]
  %s5 = inlined_call_operand.vmem [shape: f32[1,8], index: 5, kind: input, shape index: {}]
  %s6 = inlined_call_operand.vmem [shape: f32[1,8], index: 6, kind: input, shape index: {}]
  %s7 = inlined_call_operand.vmem [shape: f32[2,80,8], index: 7, kind: output, shape index: {}]
  %s8 = sld [smem:[#allocation0]]
  $region61: #{residual_block_forward.1} parent=0
    _
  %s10 = ssub.s32 1, %s8
  %s11 = scalar_select 0, %s10, %s8
  loop: start=0, step=1, limit=4
  $region2: #{residual_block_forward.1} parent=0 // loop_pre_header
    _
  $region3: #{residual_block_forward.1} parent=0 // loop_header
    %s13 = sphi 0, %s17
    %p14 = scmp.ge.s32.totalorder %s13, 4
    %s23 = sphi 0, %s25
    %s26 = sphi 0, %s23
    %s27 = sphi 0, %s26
    %s43 = sphi 0, %s27
    %s47 = sphi 0, %s47
    %s49 = sphi 0, %s47
    %s50 = sphi 0, %s49
    %s64 = sphi 0, %s50
    %s68 = sphi 0, %s68
    %s70 = sphi 0, %s68
    %s71 = sphi 0, %s70
    %s85 = sphi 0, %s71
    %s89 = sphi 0, %s89
    %s91 = sphi 0, %s89
    %s92 = sphi 0, %s91
    %s106 = sphi 0, %s92
    %s110 = sphi 0, %s110
    %s112 = sphi 0, %s110
    %s113 = sphi 0, %s112
    %s127 = sphi 0, %s113
    %s131 = sphi 0, %s131
    %s133 = sphi 0, %s131
    %s134 = sphi 0, %s133
    %s148 = sphi 0, %s134
    %s152 = sphi 0, %s152
    %s154 = sphi 0, %s152
    %s155 = sphi 0, %s154
    %s169 = sphi 0, %s155
    %s175 = sphi 0, %s177
    %s178 = sphi 0, %s175
    %s179 = sphi 0, %s178
    %s195 = sphi 0, %s179
  $region4: #{residual_block_forward.1} parent=0 // loop_header_branch
    %16 = sbr.rel (%p14) target = $region8
  $region5: #{residual_block_forward.1} parent=0 // loop_body
    %s18 = ssub.s32 %s13, 1
    %s19 = ssub.s32 %s13, 2
    %s20 = sadd.s32 %s13, 1
    %s21 = ssub.s32 %s13, %s20
    %p22 = scmp.eq.s32.totalorder %s21, 0
    %s24 = sadd.s32 %s23, 1
    %s25 = scalar_select %p22, %s23, %s24
    %p28 = pneg %p22
    %p29 = scmp.eq.s32.totalorder %s13, 1
    %p30 = por %p28, %p29
    %p31 = scmp.ne.s32.totalorder %s23, %s26
    %p32 = scmp.eq.s32.totalorder %s13, 0
    %p33 = por %p31, %p32
    %p34 = scmp.ne.s32.totalorder %s23, %s26
    %p35 = scmp.eq.s32.totalorder %s18, 1
    %p36 = por %p34, %p35
    %p37 = scmp.ne.s32.totalorder %s26, %s27
    %p38 = scmp.eq.s32.totalorder %s18, 0
    %p39 = por %p37, %p38
    %p40 = scmp.ne.s32.totalorder %s26, %s27
    %p41 = scmp.eq.s32.totalorder %s19, 1
    %p42 = por %p40, %p41
    %p44 = scmp.ne.s32.totalorder %s27, %s43
    %p45 = scmp.eq.s32.totalorder %s19, 0
    %p46 = por %p44, %p45
    %s48 = sadd.s32 %s47, 1
    %p51 = scmp.eq.s32.totalorder %s13, 1
    %p52 = scmp.ne.s32.totalorder %s47, %s49
    %p53 = scmp.eq.s32.totalorder %s13, 0
    %p54 = por %p52, %p53
    %p55 = scmp.ne.s32.totalorder %s47, %s49
    %p56 = scmp.eq.s32.totalorder %s18, 1
    %p57 = por %p55, %p56
    %p58 = scmp.ne.s32.totalorder %s49, %s50
    %p59 = scmp.eq.s32.totalorder %s18, 0
    %p60 = por %p58, %p59
    %p61 = scmp.ne.s32.totalorder %s49, %s50
    %p62 = scmp.eq.s32.totalorder %s19, 1
    %p63 = por %p61, %p62
    %p65 = scmp.ne.s32.totalorder %s50, %s64
    %p66 = scmp.eq.s32.totalorder %s19, 0
    %p67 = por %p65, %p66
    %s69 = sadd.s32 %s68, 1
    %p72 = scmp.eq.s32.totalorder %s13, 1
    %p73 = scmp.ne.s32.totalorder %s68, %s70
    %p74 = scmp.eq.s32.totalorder %s13, 0
    %p75 = por %p73, %p74
    %p76 = scmp.ne.s32.totalorder %s68, %s70
    %p77 = scmp.eq.s32.totalorder %s18, 1
    %p78 = por %p76, %p77
    %p79 = scmp.ne.s32.totalorder %s70, %s71
    %p80 = scmp.eq.s32.totalorder %s18, 0
    %p81 = por %p79, %p80
    %p82 = scmp.ne.s32.totalorder %s70, %s71
    %p83 = scmp.eq.s32.totalorder %s19, 1
    %p84 = por %p82, %p83
    %p86 = scmp.ne.s32.totalorder %s71, %s85
    %p87 = scmp.eq.s32.totalorder %s19, 0
    %p88 = por %p86, %p87
    %s90 = sadd.s32 %s89, 1
    %p93 = scmp.eq.s32.totalorder %s13, 1
    %p94 = scmp.ne.s32.totalorder %s89, %s91
    %p95 = scmp.eq.s32.totalorder %s13, 0
    %p96 = por %p94, %p95
    %p97 = scmp.ne.s32.totalorder %s89, %s91
    %p98 = scmp.eq.s32.totalorder %s18, 1
    %p99 = por %p97, %p98
    %p100 = scmp.ne.s32.totalorder %s91, %s92
    %p101 = scmp.eq.s32.totalorder %s18, 0
    %p102 = por %p100, %p101
    %p103 = scmp.ne.s32.totalorder %s91, %s92
    %p104 = scmp.eq.s32.totalorder %s19, 1
    %p105 = por %p103, %p104
    %p107 = scmp.ne.s32.totalorder %s92, %s106
    %p108 = scmp.eq.s32.totalorder %s19, 0
    %p109 = por %p107, %p108
    %s111 = sadd.s32 %s110, 1
    %p114 = scmp.eq.s32.totalorder %s13, 1
    %p115 = scmp.ne.s32.totalorder %s110, %s112
    %p116 = scmp.eq.s32.totalorder %s13, 0
    %p117 = por %p115, %p116
    %p118 = scmp.ne.s32.totalorder %s110, %s112
    %p119 = scmp.eq.s32.totalorder %s18, 1
    %p120 = por %p118, %p119
    %p121 = scmp.ne.s32.totalorder %s112, %s113
    %p122 = scmp.eq.s32.totalorder %s18, 0
    %p123 = por %p121, %p122
    %p124 = scmp.ne.s32.totalorder %s112, %s113
    %p125 = scmp.eq.s32.totalorder %s19, 1
    %p126 = por %p124, %p125
    %p128 = scmp.ne.s32.totalorder %s113, %s127
    %p129 = scmp.eq.s32.totalorder %s19, 0
    %p130 = por %p128, %p129
    %s132 = sadd.s32 %s131, 1
    %p135 = scmp.eq.s32.totalorder %s13, 1
    %p136 = scmp.ne.s32.totalorder %s131, %s133
    %p137 = scmp.eq.s32.totalorder %s13, 0
    %p138 = por %p136, %p137
    %p139 = scmp.ne.s32.totalorder %s131, %s133
    %p140 = scmp.eq.s32.totalorder %s18, 1
    %p141 = por %p139, %p140
    %p142 = scmp.ne.s32.totalorder %s133, %s134
    %p143 = scmp.eq.s32.totalorder %s18, 0
    %p144 = por %p142, %p143
    %p145 = scmp.ne.s32.totalorder %s133, %s134
    %p146 = scmp.eq.s32.totalorder %s19, 1
    %p147 = por %p145, %p146
    %p149 = scmp.ne.s32.totalorder %s134, %s148
    %p150 = scmp.eq.s32.totalorder %s19, 0
    %p151 = por %p149, %p150
    %s153 = sadd.s32 %s152, 1
    %p156 = scmp.eq.s32.totalorder %s13, 1
    %p157 = scmp.ne.s32.totalorder %s152, %s154
    %p158 = scmp.eq.s32.totalorder %s13, 0
    %p159 = por %p157, %p158
    %p160 = scmp.ne.s32.totalorder %s152, %s154
    %p161 = scmp.eq.s32.totalorder %s18, 1
    %p162 = por %p160, %p161
    %p163 = scmp.ne.s32.totalorder %s154, %s155
    %p164 = scmp.eq.s32.totalorder %s18, 0
    %p165 = por %p163, %p164
    %p166 = scmp.ne.s32.totalorder %s154, %s155
    %p167 = scmp.eq.s32.totalorder %s19, 1
    %p168 = por %p166, %p167
    %p170 = scmp.ne.s32.totalorder %s155, %s169
    %p171 = scmp.eq.s32.totalorder %s19, 0
    %p172 = por %p170, %p171
    %s173 = ssub.s32 %s13, %s20
    %p174 = scmp.eq.s32.totalorder %s173, 0
    %s176 = sadd.s32 %s175, 1
    %s177 = scalar_select %p174, %s175, %s176
    %p180 = pneg %p174
    %p181 = scmp.eq.s32.totalorder %s13, 1
    %p182 = por %p180, %p181
    %p183 = scmp.ne.s32.totalorder %s175, %s178
    %p184 = scmp.eq.s32.totalorder %s13, 0
    %p185 = por %p183, %p184
    %p186 = scmp.ne.s32.totalorder %s175, %s178
    %p187 = scmp.eq.s32.totalorder %s18, 1
    %p188 = por %p186, %p187
    %p189 = scmp.ne.s32.totalorder %s178, %s179
    %p190 = scmp.eq.s32.totalorder %s18, 0
    %p191 = por %p189, %p190
    %p192 = scmp.ne.s32.totalorder %s178, %s179
    %p193 = scmp.eq.s32.totalorder %s19, 1
    %p194 = por %p192, %p193
    %p196 = scmp.ne.s32.totalorder %s179, %s195
    %p197 = scmp.eq.s32.totalorder %s19, 0
    %p198 = por %p196, %p197
    %p199 = scmp.le.s32.totalorder 1, %s13
    %p200 = scmp.lt.s32.totalorder %s13, 3
    %p201 = pnand %p199, %p200
    %p202 = pneg %p201
    // Predicated region
    $region9: #{residual_block_forward.1} parent=5 // pred_check
      _
    $region10: #{residual_block_forward.1} parent=5 // pred_check_branch
      %204 = sbr.rel (%p201) target = $region12
    $region11: #{residual_block_forward.1} parent=5 // pred_region
      %s205 = ssub.s32 %s13, 1
      // Predicated region
      $region13: #{residual_block_forward.1} parent=11 // pred_check
        %p206 = pneg %p60
      $region14: #{residual_block_forward.1} parent=11 // pred_check_branch
        %208 = sbr.rel (%p206) target = $region16
      $region15: #{residual_block_forward.1} parent=11 // pred_region
        _
      $region16: #{residual_block_forward.1} parent=11 // pred_fallthru
        _
      // Predicated region
      $region17: #{residual_block_forward.1} parent=11 // pred_check
        %p209 = pneg %p81
      $region18: #{residual_block_forward.1} parent=11 // pred_check_branch
        %211 = sbr.rel (%p209) target = $region20
      $region19: #{residual_block_forward.1} parent=11 // pred_region
        _
      $region20: #{residual_block_forward.1} parent=11 // pred_fallthru
        _
      // Predicated region
      $region21: #{residual_block_forward.1} parent=11 // pred_check
        %p212 = pneg %p102
      $region22: #{residual_block_forward.1} parent=11 // pred_check_branch
        %214 = sbr.rel (%p212) target = $region24
      $region23: #{residual_block_forward.1} parent=11 // pred_region
        _
      $region24: #{residual_block_forward.1} parent=11 // pred_fallthru
        _
      // Predicated region
      $region25: #{residual_block_forward.1} parent=11 // pred_check
        %p215 = pneg %p123
      $region26: #{residual_block_forward.1} parent=11 // pred_check_branch
        %217 = sbr.rel (%p215) target = $region28
      $region27: #{residual_block_forward.1} parent=11 // pred_region
        _
      $region28: #{residual_block_forward.1} parent=11 // pred_fallthru
        _
      // Predicated region
      $region29: #{residual_block_forward.1} parent=11 // pred_check
        %p218 = pneg %p144
      $region30: #{residual_block_forward.1} parent=11 // pred_check_branch
        %220 = sbr.rel (%p218) target = $region32
      $region31: #{residual_block_forward.1} parent=11 // pred_region
        _
      $region32: #{residual_block_forward.1} parent=11 // pred_fallthru
        _
      // Predicated region
      $region33: #{residual_block_forward.1} parent=11 // pred_check
        %p221 = pneg %p165
      $region34: #{residual_block_forward.1} parent=11 // pred_check_branch
        %223 = sbr.rel (%p221) target = $region36
      $region35: #{residual_block_forward.1} parent=11 // pred_region
        _
      $region36: #{residual_block_forward.1} parent=11 // pred_fallthru
        _
    $region12: #{residual_block_forward.1} parent=5 // pred_fallthru
      _
    %p224 = scmp.lt.s32.totalorder %s13, 2
    // Predicated region
    $region37: #{residual_block_forward.1} parent=5 // pred_check
      %p225 = pneg %p224
    $region38: #{residual_block_forward.1} parent=5 // pred_check_branch
      %227 = sbr.rel (%p225) target = $region40
    $region39: #{residual_block_forward.1} parent=5 // pred_region
      // Predicated region
      $region41: #{residual_block_forward.1} parent=39 // pred_check
        %p228 = pneg %p33
      $region42: #{residual_block_forward.1} parent=39 // pred_check_branch
        %230 = sbr.rel (%p228) target = $region44
      $region43: #{residual_block_forward.1} parent=39 // pred_region
        %p231 = scmp.lt.s32.totalorder %s13, 1
        %s232 = scalar_select %p231, %s13, 1
        %s233 = smul.addr %s232, 14
        %s234 = smul.addr %s233, 8
        %s235 = scalar_lea.vmem %s0, %s234
      $region44: #{residual_block_forward.1} parent=39 // pred_fallthru
        _
    $region40: #{residual_block_forward.1} parent=5 // pred_fallthru
      _
    %p236 = scmp.le.s32.totalorder 1, %s13
    %p237 = scmp.lt.s32.totalorder %s13, 3
    %p238 = pnand %p236, %p237
    %p239 = pneg %p238
    // Predicated region
    $region45: #{residual_block_forward.1} parent=5 // pred_check
      _
    $region46: #{residual_block_forward.1} parent=5 // pred_check_branch
      %241 = sbr.rel (%p238) target = $region48
    $region47: #{residual_block_forward.1} parent=5 // pred_region
      %s242 = ssub.s32 %s13, 1
      %p243 = scmp.lt.s32.totalorder %s18, 1
      %s244 = scalar_select %p243, %s18, 1
      %s245 = smul.addr %s244, 14
      %s246 = smul.addr %s245, 8
      %s247 = scalar_lea.vmem %s0, %s246
      %p248 = pneg %p39
      %p249 = pneg %p36
      %p250 = pneg %p60
      %p251 = pneg %p57
      %p252 = pneg %p81
      %p253 = pneg %p78
      %p254 = pneg %p102
      %p255 = pneg %p99
      %p256 = pneg %p123
      %p257 = pneg %p120
      %p258 = pneg %p144
      %p259 = pneg %p141
      %p260 = pneg %p165
      %p261 = pneg %p162
      %p262 = pneg %p191
      %p263 = pneg %p188
      %p264 = scmp.lt.s32.totalorder %s18, 1
      %s265 = scalar_select %p264, %s18, 1
      %s266 = smul.addr %s265, 10
      %s267 = smul.addr %s266, 8
      %s268 = scalar_lea.vmem %s7, %s267
      %p269 = scmp.lt.s32.totalorder %s18, 1
      %s270 = scalar_select %p269, %s18, 1
      %s271 = smul.addr %s270, 14
      %s272 = smul.addr %s271, 8
      %s273 = scalar_lea.vmem %s0, %s272
      %p274 = scmp.lt.s32.totalorder %s18, 1
      %s275 = scalar_select %p274, %s18, 1
      %s276 = smul.addr %s275, 10
      %s277 = smul.addr %s276, 8
      %s278 = scalar_lea.vmem %s7, %s277
      %v279 = vlaneseq
      %v280 = vshrl.u32 %v279, 7
      %v281 = vadd.s32 %v280, 8
      %v282 = vadd.s32 %v280, 16
      %v283 = vadd.s32 %v280, 24
      %v284 = vadd.s32 %v280, 32
      %v285 = vadd.s32 %v280, 40
      %v286 = vadd.s32 %v280, 48
      %v287 = vadd.s32 %v280, 56
      %v288 = vadd.s32 %v280, 64
      %v289 = vadd.s32 %v280, 72
      %vm290 = vcmp.lt.s32.totalorder %v280, 0
      %v291 = vsub.s32 0, %v280
      %v292 = vsel %vm290, %v291, %v280
      %v293 = vand.u32 %v292, 65535
      %v294 = vshrl.u32 %v292, 16
      %v296 = vmul.u32 %v293, 52429
      %v297 = vmul.u32 %v293, 52428
      %v298 = vmul.u32 %v294, 52429
      %v299 = vmul.u32 %v294, 52428
      %v300 = vshll.u32 %v297, 16
      %v301 = vshrl.u32 %v297, 16
      %v302 = vshll.u32 %v298, 16
      %v303 = vshrl.u32 %v298, 16
      %vm304 = vc.u32 %v296, %v300
      %v305 = vsel %vm304, 1, 0
      %v306 = vadd.s32 %v296, %v300
      %v307 = vadd.s32 %v299, %v305
      %vm308 = vc.u32 %v306, %v302
      %v309 = vsel %vm308, 1, 0
      %v310 = vadd.s32 %v306, %v302
      %v311 = vadd.s32 %v307, %v309
      %v312 = vadd.s32 %v311, %v301
      %v313 = vadd.s32 %v312, %v303
      %v314 = vshrl.u32 %v313, 3
      %v315 = vmul.u32 %v314, 10
      %v316 = vsub.s32 %v292, %v315
      %v317 = vsub.s32 0, %v316
      %v318 = vsel %vm290, %v317, %v316
      %vm319 = vcmp.lt.s32.totalorder %v281, 0
      %v320 = vsub.s32 0, %v281
      %v321 = vsel %vm319, %v320, %v281
      %v322 = vand.u32 %v321, 65535
      %v323 = vshrl.u32 %v321, 16
      %v325 = vmul.u32 %v322, 52429
      %v326 = vmul.u32 %v322, 52428
      %v327 = vmul.u32 %v323, 52429
      %v328 = vmul.u32 %v323, 52428
      %v329 = vshll.u32 %v326, 16
      %v330 = vshrl.u32 %v326, 16
      %v331 = vshll.u32 %v327, 16
      %v332 = vshrl.u32 %v327, 16
      %vm333 = vc.u32 %v325, %v329
      %v334 = vsel %vm333, 1, 0
      %v335 = vadd.s32 %v325, %v329
      %v336 = vadd.s32 %v328, %v334
      %vm337 = vc.u32 %v335, %v331
      %v338 = vsel %vm337, 1, 0
      %v339 = vadd.s32 %v335, %v331
      %v340 = vadd.s32 %v336, %v338
      %v341 = vadd.s32 %v340, %v330
      %v342 = vadd.s32 %v341, %v332
      %v343 = vshrl.u32 %v342, 3
      %v344 = vmul.u32 %v343, 10
      %v345 = vsub.s32 %v321, %v344
      %v346 = vsub.s32 0, %v345
      %v347 = vsel %vm319, %v346, %v345
      %vm348 = vcmp.lt.s32.totalorder %v282, 0
      %v349 = vsub.s32 0, %v282
      %v350 = vsel %vm348, %v349, %v282
      %v351 = vand.u32 %v350, 65535
      %v352 = vshrl.u32 %v350, 16
      %v354 = vmul.u32 %v351, 52429
      %v355 = vmul.u32 %v351, 52428
      %v356 = vmul.u32 %v352, 52429
      %v357 = vmul.u32 %v352, 52428
      %v358 = vshll.u32 %v355, 16
      %v359 = vshrl.u32 %v355, 16
      %v360 = vshll.u32 %v356, 16
      %v361 = vshrl.u32 %v356, 16
      %vm362 = vc.u32 %v354, %v358
      %v363 = vsel %vm362, 1, 0
      %v364 = vadd.s32 %v354, %v358
      %v365 = vadd.s32 %v357, %v363
      %vm366 = vc.u32 %v364, %v360
      %v367 = vsel %vm366, 1, 0
      %v368 = vadd.s32 %v364, %v360
      %v369 = vadd.s32 %v365, %v367
      %v370 = vadd.s32 %v369, %v359
      %v371 = vadd.s32 %v370, %v361
      %v372 = vshrl.u32 %v371, 3
      %v373 = vmul.u32 %v372, 10
      %v374 = vsub.s32 %v350, %v373
      %v375 = vsub.s32 0, %v374
      %v376 = vsel %vm348, %v375, %v374
      %vm377 = vcmp.lt.s32.totalorder %v283, 0
      %v378 = vsub.s32 0, %v283
      %v379 = vsel %vm377, %v378, %v283
      %v380 = vand.u32 %v379, 65535
      %v381 = vshrl.u32 %v379, 16
      %v383 = vmul.u32 %v380, 52429
      %v384 = vmul.u32 %v380, 52428
      %v385 = vmul.u32 %v381, 52429
      %v386 = vmul.u32 %v381, 52428
      %v387 = vshll.u32 %v384, 16
      %v388 = vshrl.u32 %v384, 16
      %v389 = vshll.u32 %v385, 16
      %v390 = vshrl.u32 %v385, 16
      %vm391 = vc.u32 %v383, %v387
      %v392 = vsel %vm391, 1, 0
      %v393 = vadd.s32 %v383, %v387
      %v394 = vadd.s32 %v386, %v392
      %vm395 = vc.u32 %v393, %v389
      %v396 = vsel %vm395, 1, 0
      %v397 = vadd.s32 %v393, %v389
      %v398 = vadd.s32 %v394, %v396
      %v399 = vadd.s32 %v398, %v388
      %v400 = vadd.s32 %v399, %v390
      %v401 = vshrl.u32 %v400, 3
      %v402 = vmul.u32 %v401, 10
      %v403 = vsub.s32 %v379, %v402
      %v404 = vsub.s32 0, %v403
      %v405 = vsel %vm377, %v404, %v403
      %vm406 = vcmp.lt.s32.totalorder %v284, 0
      %v407 = vsub.s32 0, %v284
      %v408 = vsel %vm406, %v407, %v284
      %v409 = vand.u32 %v408, 65535
      %v410 = vshrl.u32 %v408, 16
      %v412 = vmul.u32 %v409, 52429
      %v413 = vmul.u32 %v409, 52428
      %v414 = vmul.u32 %v410, 52429
      %v415 = vmul.u32 %v410, 52428
      %v416 = vshll.u32 %v413, 16
      %v417 = vshrl.u32 %v413, 16
      %v418 = vshll.u32 %v414, 16
      %v419 = vshrl.u32 %v414, 16
      %vm420 = vc.u32 %v412, %v416
      %v421 = vsel %vm420, 1, 0
      %v422 = vadd.s32 %v412, %v416
      %v423 = vadd.s32 %v415, %v421
      %vm424 = vc.u32 %v422, %v418
      %v425 = vsel %vm424, 1, 0
      %v426 = vadd.s32 %v422, %v418
      %v427 = vadd.s32 %v423, %v425
      %v428 = vadd.s32 %v427, %v417
      %v429 = vadd.s32 %v428, %v419
      %v430 = vshrl.u32 %v429, 3
      %v431 = vmul.u32 %v430, 10
      %v432 = vsub.s32 %v408, %v431
      %v433 = vsub.s32 0, %v432
      %v434 = vsel %vm406, %v433, %v432
      %vm435 = vcmp.lt.s32.totalorder %v285, 0
      %v436 = vsub.s32 0, %v285
      %v437 = vsel %vm435, %v436, %v285
      %v438 = vand.u32 %v437, 65535
      %v439 = vshrl.u32 %v437, 16
      %v441 = vmul.u32 %v438, 52429
      %v442 = vmul.u32 %v438, 52428
      %v443 = vmul.u32 %v439, 52429
      %v444 = vmul.u32 %v439, 52428
      %v445 = vshll.u32 %v442, 16
      %v446 = vshrl.u32 %v442, 16
      %v447 = vshll.u32 %v443, 16
      %v448 = vshrl.u32 %v443, 16
      %vm449 = vc.u32 %v441, %v445
      %v450 = vsel %vm449, 1, 0
      %v451 = vadd.s32 %v441, %v445
      %v452 = vadd.s32 %v444, %v450
      %vm453 = vc.u32 %v451, %v447
      %v454 = vsel %vm453, 1, 0
      %v455 = vadd.s32 %v451, %v447
      %v456 = vadd.s32 %v452, %v454
      %v457 = vadd.s32 %v456, %v446
      %v458 = vadd.s32 %v457, %v448
      %v459 = vshrl.u32 %v458, 3
      %v460 = vmul.u32 %v459, 10
      %v461 = vsub.s32 %v437, %v460
      %v462 = vsub.s32 0, %v461
      %v463 = vsel %vm435, %v462, %v461
      %vm464 = vcmp.lt.s32.totalorder %v286, 0
      %v465 = vsub.s32 0, %v286
      %v466 = vsel %vm464, %v465, %v286
      %v467 = vand.u32 %v466, 65535
      %v468 = vshrl.u32 %v466, 16
      %v470 = vmul.u32 %v467, 52429
      %v471 = vmul.u32 %v467, 52428
      %v472 = vmul.u32 %v468, 52429
      %v473 = vmul.u32 %v468, 52428
      %v474 = vshll.u32 %v471, 16
      %v475 = vshrl.u32 %v471, 16
      %v476 = vshll.u32 %v472, 16
      %v477 = vshrl.u32 %v472, 16
      %vm478 = vc.u32 %v470, %v474
      %v479 = vsel %vm478, 1, 0
      %v480 = vadd.s32 %v470, %v474
      %v481 = vadd.s32 %v473, %v479
      %vm482 = vc.u32 %v480, %v476
      %v483 = vsel %vm482, 1, 0
      %v484 = vadd.s32 %v480, %v476
      %v485 = vadd.s32 %v481, %v483
      %v486 = vadd.s32 %v485, %v475
      %v487 = vadd.s32 %v486, %v477
      %v488 = vshrl.u32 %v487, 3
      %v489 = vmul.u32 %v488, 10
      %v490 = vsub.s32 %v466, %v489
      %v491 = vsub.s32 0, %v490
      %v492 = vsel %vm464, %v491, %v490
      %vm493 = vcmp.lt.s32.totalorder %v287, 0
      %v494 = vsub.s32 0, %v287
      %v495 = vsel %vm493, %v494, %v287
      %v496 = vand.u32 %v495, 65535
      %v497 = vshrl.u32 %v495, 16
      %v499 = vmul.u32 %v496, 52429
      %v500 = vmul.u32 %v496, 52428
      %v501 = vmul.u32 %v497, 52429
      %v502 = vmul.u32 %v497, 52428
      %v503 = vshll.u32 %v500, 16
      %v504 = vshrl.u32 %v500, 16
      %v505 = vshll.u32 %v501, 16
      %v506 = vshrl.u32 %v501, 16
      %vm507 = vc.u32 %v499, %v503
      %v508 = vsel %vm507, 1, 0
      %v509 = vadd.s32 %v499, %v503
      %v510 = vadd.s32 %v502, %v508
      %vm511 = vc.u32 %v509, %v505
      %v512 = vsel %vm511, 1, 0
      %v513 = vadd.s32 %v509, %v505
      %v514 = vadd.s32 %v510, %v512
      %v515 = vadd.s32 %v514, %v504
      %v516 = vadd.s32 %v515, %v506
      %v517 = vshrl.u32 %v516, 3
      %v518 = vmul.u32 %v517, 10
      %v519 = vsub.s32 %v495, %v518
      %v520 = vsub.s32 0, %v519
      %v521 = vsel %vm493, %v520, %v519
      %vm522 = vcmp.lt.s32.totalorder %v288, 0
      %v523 = vsub.s32 0, %v288
      %v524 = vsel %vm522, %v523, %v288
      %v525 = vand.u32 %v524, 65535
      %v526 = vshrl.u32 %v524, 16
      %v528 = vmul.u32 %v525, 52429
      %v529 = vmul.u32 %v525, 52428
      %v530 = vmul.u32 %v526, 52429
      %v531 = vmul.u32 %v526, 52428
      %v532 = vshll.u32 %v529, 16
      %v533 = vshrl.u32 %v529, 16
      %v534 = vshll.u32 %v530, 16
      %v535 = vshrl.u32 %v530, 16
      %vm536 = vc.u32 %v528, %v532
      %v537 = vsel %vm536, 1, 0
      %v538 = vadd.s32 %v528, %v532
      %v539 = vadd.s32 %v531, %v537
      %vm540 = vc.u32 %v538, %v534
      %v541 = vsel %vm540, 1, 0
      %v542 = vadd.s32 %v538, %v534
      %v543 = vadd.s32 %v539, %v541
      %v544 = vadd.s32 %v543, %v533
      %v545 = vadd.s32 %v544, %v535
      %v546 = vshrl.u32 %v545, 3
      %v547 = vmul.u32 %v546, 10
      %v548 = vsub.s32 %v524, %v547
      %v549 = vsub.s32 0, %v548
      %v550 = vsel %vm522, %v549, %v548
      %vm551 = vcmp.lt.s32.totalorder %v289, 0
      %v552 = vsub.s32 0, %v289
      %v553 = vsel %vm551, %v552, %v289
      %v554 = vand.u32 %v553, 65535
      %v555 = vshrl.u32 %v553, 16
      %v557 = vmul.u32 %v554, 52429
      %v558 = vmul.u32 %v554, 52428
      %v559 = vmul.u32 %v555, 52429
      %v560 = vmul.u32 %v555, 52428
      %v561 = vshll.u32 %v558, 16
      %v562 = vshrl.u32 %v558, 16
      %v563 = vshll.u32 %v559, 16
      %v564 = vshrl.u32 %v559, 16
      %vm565 = vc.u32 %v557, %v561
      %v566 = vsel %vm565, 1, 0
      %v567 = vadd.s32 %v557, %v561
      %v568 = vadd.s32 %v560, %v566
      %vm569 = vc.u32 %v567, %v563
      %v570 = vsel %vm569, 1, 0
      %v571 = vadd.s32 %v567, %v563
      %v572 = vadd.s32 %v568, %v570
      %v573 = vadd.s32 %v572, %v562
      %v574 = vadd.s32 %v573, %v564
      %v575 = vshrl.u32 %v574, 3
      %v576 = vmul.u32 %v575, 10
      %v577 = vsub.s32 %v553, %v576
      %v578 = vsub.s32 0, %v577
      %v579 = vsel %vm551, %v578, %v577
      %vm580 = vcmp.ne.s32.totalorder %v318, 0
      %vm581 = vcmp.ne.s32.totalorder %v347, 0
      %vm582 = vcmp.ne.s32.totalorder %v376, 0
      %vm583 = vcmp.ne.s32.totalorder %v405, 0
      %vm584 = vcmp.ne.s32.totalorder %v434, 0
      %vm585 = vcmp.ne.s32.totalorder %v463, 0
      %vm586 = vcmp.ne.s32.totalorder %v492, 0
      %vm587 = vcmp.ne.s32.totalorder %v521, 0
      %vm588 = vcmp.ne.s32.totalorder %v550, 0
      %vm589 = vcmp.ne.s32.totalorder %v579, 0
      %vm590 = vcmp.lt.s32.totalorder %v318, 0
      %vm591 = vcmp.lt.s32.totalorder %v347, 0
      %vm592 = vcmp.lt.s32.totalorder %v376, 0
      %vm593 = vcmp.lt.s32.totalorder %v405, 0
      %vm594 = vcmp.lt.s32.totalorder %v434, 0
      %vm595 = vcmp.lt.s32.totalorder %v463, 0
      %vm596 = vcmp.lt.s32.totalorder %v492, 0
      %vm597 = vcmp.lt.s32.totalorder %v521, 0
      %vm598 = vcmp.lt.s32.totalorder %v550, 0
      %vm599 = vcmp.lt.s32.totalorder %v579, 0
      %vm600 = vmand %vm590, %vm580
      %vm601 = vmand %vm591, %vm581
      %vm602 = vmand %vm592, %vm582
      %vm603 = vmand %vm593, %vm583
      %vm604 = vmand %vm594, %vm584
      %vm605 = vmand %vm595, %vm585
      %vm606 = vmand %vm596, %vm586
      %vm607 = vmand %vm597, %vm587
      %vm608 = vmand %vm598, %vm588
      %vm609 = vmand %vm599, %vm589
      %v610 = vadd.s32 %v318, 10
      %v611 = vadd.s32 %v347, 10
      %v612 = vadd.s32 %v376, 10
      %v613 = vadd.s32 %v405, 10
      %v614 = vadd.s32 %v434, 10
      %v615 = vadd.s32 %v463, 10
      %v616 = vadd.s32 %v492, 10
      %v617 = vadd.s32 %v521, 10
      %v618 = vadd.s32 %v550, 10
      %v619 = vadd.s32 %v579, 10
      %v620 = vsel %vm600, %v610, %v318
      %v621 = vsel %vm601, %v611, %v347
      %v622 = vsel %vm602, %v612, %v376
      %v623 = vsel %vm603, %v613, %v405
      %v624 = vsel %vm604, %v614, %v434
      %v625 = vsel %vm605, %v615, %v463
      %v626 = vsel %vm606, %v616, %v492
      %v627 = vsel %vm607, %v617, %v521
      %v628 = vsel %vm608, %v618, %v550
      %v629 = vsel %vm609, %v619, %v579
      %vm630 = vcmp.lt.s32.totalorder %v620, 8
      %vm631 = vcmp.lt.s32.totalorder %v621, 8
      %vm632 = vcmp.lt.s32.totalorder %v622, 8
      %vm633 = vcmp.lt.s32.totalorder %v623, 8
      %vm634 = vcmp.lt.s32.totalorder %v624, 8
      %vm635 = vcmp.lt.s32.totalorder %v625, 8
      %vm636 = vcmp.lt.s32.totalorder %v626, 8
      %vm637 = vcmp.lt.s32.totalorder %v627, 8
      %vm638 = vcmp.lt.s32.totalorder %v628, 8
      %vm639 = vcmp.lt.s32.totalorder %v629, 8
      %vm640 = vcmask 64512
      %641 = vst.msk [vmem:[#allocation2] sm:$0xff] %vm640, 0.0
      %vm642 = vcmask 59392
      %643 = vst.msk [vmem:[#allocation2 + $0x8] sm:$0x7] %vm642, 0.0
      %644 = vst.msk [vmem:[#allocation2 + $0x5b] sm:$0xff] %vm640, 0.0
      %645 = vst.msk [vmem:[#allocation2 + $0x63] sm:$0xff] %vm640, 0.0
      %646 = vst.msk [vmem:[#allocation2 + $0x6b] sm:$0x7] %vm642, 0.0
      %v647 = vld [vmem:[%s273] sm:$0xff]
      %v648 = vld [vmem:[%s273 + $0x8] sm:$0xff]
      %v649 = vld [vmem:[%s273 + $0x10] sm:$0xff]
      %v650 = vld [vmem:[%s273 + $0x18] sm:$0xff]
      %v651 = vld [vmem:[%s273 + $0x20] sm:$0xff]
      %v652 = vld [vmem:[%s273 + $0x28] sm:$0xff]
      %v653 = vld [vmem:[%s273 + $0x30] sm:$0xff]
      %v654 = vld [vmem:[%s273 + $0x38] sm:$0xff]
      %v655 = vld [vmem:[%s273 + $0x40] sm:$0xff]
      %v656 = vld [vmem:[%s273 + $0x48] sm:$0xff]
      %v657 = vld [vmem:[%s1] sm:$0xff]
      %v658 = vld [vmem:[%s273 + $0x1] sm:$0xff]
      %v659 = vld [vmem:[%s273 + $0x9] sm:$0xff]
      %v660 = vld [vmem:[%s273 + $0x11] sm:$0xff]
      %v661 = vld [vmem:[%s273 + $0x19] sm:$0xff]
      %v662 = vld [vmem:[%s273 + $0x21] sm:$0xff]
      %v663 = vld [vmem:[%s273 + $0x29] sm:$0xff]
      %v664 = vld [vmem:[%s273 + $0x31] sm:$0xff]
      %v665 = vld [vmem:[%s273 + $0x39] sm:$0xff]
      %v666 = vld [vmem:[%s273 + $0x41] sm:$0xff]
      %v667 = vld [vmem:[%s273 + $0x49] sm:$0xff]
      %s668 = scalar_lea.vmem %s1, 8
      %v669 = vld [vmem:[%s668] sm:$0xff]
      %v671 = vsel %vm640, %v658, 0
      %v674 = vsel %vm640, %v659, 0
      %v677 = vsel %vm640, %v660, 0
      %v680 = vsel %vm640, %v661, 0
      %v683 = vsel %vm640, %v662, 0
      %v686 = vsel %vm640, %v663, 0
      %v689 = vsel %vm640, %v664, 0
      %v692 = vsel %vm640, %v665, 0
      %v695 = vsel %vm640, %v666, 0
      %v698 = vsel %vm640, %v667, 0
      %700 = vmatpush.msra.mxu0 0.0
      %701 = vmatpush.msra.mxu0 0.0
      %702 = vmatpush.msra.mxu0 0.0
      %703 = vmatpush.msra.mxu0 0.0
      %704 = vmatpush.msra.mxu0 0.0
      %705 = vmatpush.msra.mxu0 0.0
      %706 = vmatpush.msra.mxu0 0.0
      %707 = vmatpush.msra.mxu0 0.0
      %708 = vmatpush.msra.mxu0 0.0
      %709 = vmatpush.msra.mxu0 0.0
      %710 = vmatpush.msra.mxu0 0.0
      %711 = vmatpush.msra.mxu0 0.0
      %712 = vmatpush.msra.mxu0 0.0
      %713 = vmatpush.msra.mxu0 0.0
      %714 = vmatpush.msra.mxu0 0.0
      %715 = vmatpush.msra.mxu0 %v669
      %716 = vmatmul.f32.gmra.mxu0 %v671
      %v717 = vpop.f32.mrf.mxu0
      %v718 = vadd.f32 0.0, %v717
      %719 = vmatmul.f32.gmra.mxu0 %v674
      %v720 = vpop.f32.mrf.mxu0
      %v721 = vadd.f32 0.0, %v720
      %722 = vmatmul.f32.gmra.mxu0 %v677
      %v723 = vpop.f32.mrf.mxu0
      %v724 = vadd.f32 0.0, %v723
      %725 = vmatmul.f32.gmra.mxu0 %v680
      %v726 = vpop.f32.mrf.mxu0
      %v727 = vadd.f32 0.0, %v726
      %728 = vmatmul.f32.gmra.mxu0 %v683
      %v729 = vpop.f32.mrf.mxu0
      %v730 = vadd.f32 0.0, %v729
      %731 = vmatmul.f32.gmra.mxu0 %v686
      %v732 = vpop.f32.mrf.mxu0
      %v733 = vadd.f32 0.0, %v732
      %734 = vmatmul.f32.gmra.mxu0 %v689
      %v735 = vpop.f32.mrf.mxu0
      %v736 = vadd.f32 0.0, %v735
      %737 = vmatmul.f32.gmra.mxu0 %v692
      %v738 = vpop.f32.mrf.mxu0
      %v739 = vadd.f32 0.0, %v738
      %740 = vmatmul.f32.gmra.mxu0 %v695
      %v741 = vpop.f32.mrf.mxu0
      %v742 = vadd.f32 0.0, %v741
      %743 = vmatmul.f32.gmra.mxu0 %v698
      %v744 = vpop.f32.mrf.mxu0
      %v745 = vadd.f32 0.0, %v744
      %746 = vdwg.mxu0
      %v748 = vsel %vm640, %v647, 0
      %v751 = vsel %vm640, %v648, 0
      %v754 = vsel %vm640, %v649, 0
      %v757 = vsel %vm640, %v650, 0
      %v760 = vsel %vm640, %v651, 0
      %v763 = vsel %vm640, %v652, 0
      %v766 = vsel %vm640, %v653, 0
      %v769 = vsel %vm640, %v654, 0
      %v772 = vsel %vm640, %v655, 0
      %v775 = vsel %vm640, %v656, 0
      %777 = vmatpush.msra.mxu0 0.0
      %778 = vmatpush.msra.mxu0 0.0
      %779 = vmatpush.msra.mxu0 0.0
      %780 = vmatpush.msra.mxu0 0.0
      %781 = vmatpush.msra.mxu0 0.0
      %782 = vmatpush.msra.mxu0 0.0
      %783 = vmatpush.msra.mxu0 0.0
      %784 = vmatpush.msra.mxu0 0.0
      %785 = vmatpush.msra.mxu0 0.0
      %786 = vmatpush.msra.mxu0 0.0
      %787 = vmatpush.msra.mxu0 0.0
      %788 = vmatpush.msra.mxu0 0.0
      %789 = vmatpush.msra.mxu0 0.0
      %790 = vmatpush.msra.mxu0 0.0
      %791 = vmatpush.msra.mxu0 0.0
      %792 = vmatpush.msra.mxu0 %v657
      %793 = vmatmul.f32.gmra.mxu0 %v748
      %v794 = vpop.f32.mrf.mxu0
      %v795 = vadd.f32 %v718, %v794
      %796 = vmatmul.f32.gmra.mxu0 %v751
      %v797 = vpop.f32.mrf.mxu0
      %v798 = vadd.f32 %v721, %v797
      %799 = vmatmul.f32.gmra.mxu0 %v754
      %v800 = vpop.f32.mrf.mxu0
      %v801 = vadd.f32 %v724, %v800
      %802 = vmatmul.f32.gmra.mxu0 %v757
      %v803 = vpop.f32.mrf.mxu0
      %v804 = vadd.f32 %v727, %v803
      %805 = vmatmul.f32.gmra.mxu0 %v760
      %v806 = vpop.f32.mrf.mxu0
      %v807 = vadd.f32 %v730, %v806
      %808 = vmatmul.f32.gmra.mxu0 %v763
      %v809 = vpop.f32.mrf.mxu0
      %v810 = vadd.f32 %v733, %v809
      %811 = vmatmul.f32.gmra.mxu0 %v766
      %v812 = vpop.f32.mrf.mxu0
      %v813 = vadd.f32 %v736, %v812
      %814 = vmatmul.f32.gmra.mxu0 %v769
      %v815 = vpop.f32.mrf.mxu0
      %v816 = vadd.f32 %v739, %v815
      %817 = vmatmul.f32.gmra.mxu0 %v772
      %v818 = vpop.f32.mrf.mxu0
      %v819 = vadd.f32 %v742, %v818
      %820 = vmatmul.f32.gmra.mxu0 %v775
      %v821 = vpop.f32.mrf.mxu0
      %v822 = vadd.f32 %v745, %v821
      %823 = vdwg.mxu0
      %v824 = vld [vmem:[%s273 + $0x2] sm:$0xff]
      %v825 = vld [vmem:[%s273 + $0xa] sm:$0xff]
      %v826 = vld [vmem:[%s273 + $0x12] sm:$0xff]
      %v827 = vld [vmem:[%s273 + $0x1a] sm:$0xff]
      %v828 = vld [vmem:[%s273 + $0x22] sm:$0xff]
      %v829 = vld [vmem:[%s273 + $0x2a] sm:$0xff]
      %v830 = vld [vmem:[%s273 + $0x32] sm:$0xff]
      %v831 = vld [vmem:[%s273 + $0x3a] sm:$0xff]
      %v832 = vld [vmem:[%s273 + $0x42] sm:$0xff]
      %v833 = vld [vmem:[%s273 + $0x4a] sm:$0xff]
      %s834 = scalar_lea.vmem %s1, 16
      %v835 = vld [vmem:[%s834] sm:$0xff]
      %v837 = vsel %vm640, %v824, 0
      %v840 = vsel %vm640, %v825, 0
      %v843 = vsel %vm640, %v826, 0
      %v846 = vsel %vm640, %v827, 0
      %v849 = vsel %vm640, %v828, 0
      %v852 = vsel %vm640, %v829, 0
      %v855 = vsel %vm640, %v830, 0
      %v858 = vsel %vm640, %v831, 0
      %v861 = vsel %vm640, %v832, 0
      %v864 = vsel %vm640, %v833, 0
      %866 = vmatpush.msra.mxu0 0.0
      %867 = vmatpush.msra.mxu0 0.0
      %868 = vmatpush.msra.mxu0 0.0
      %869 = vmatpush.msra.mxu0 0.0
      %870 = vmatpush.msra.mxu0 0.0
      %871 = vmatpush.msra.mxu0 0.0
      %872 = vmatpush.msra.mxu0 0.0
      %873 = vmatpush.msra.mxu0 0.0
      %874 = vmatpush.msra.mxu0 0.0
      %875 = vmatpush.msra.mxu0 0.0
      %876 = vmatpush.msra.mxu0 0.0
      %877 = vmatpush.msra.mxu0 0.0
      %878 = vmatpush.msra.mxu0 0.0
      %879 = vmatpush.msra.mxu0 0.0
      %880 = vmatpush.msra.mxu0 0.0
      %881 = vmatpush.msra.mxu0 %v835
      %882 = vmatmul.f32.gmra.mxu0 %v837
      %v883 = vpop.f32.mrf.mxu0
      %v884 = vadd.f32 0.0, %v883
      %885 = vmatmul.f32.gmra.mxu0 %v840
      %v886 = vpop.f32.mrf.mxu0
      %v887 = vadd.f32 0.0, %v886
      %888 = vmatmul.f32.gmra.mxu0 %v843
      %v889 = vpop.f32.mrf.mxu0
      %v890 = vadd.f32 0.0, %v889
      %891 = vmatmul.f32.gmra.mxu0 %v846
      %v892 = vpop.f32.mrf.mxu0
      %v893 = vadd.f32 0.0, %v892
      %894 = vmatmul.f32.gmra.mxu0 %v849
      %v895 = vpop.f32.mrf.mxu0
      %v896 = vadd.f32 0.0, %v895
      %897 = vmatmul.f32.gmra.mxu0 %v852
      %v898 = vpop.f32.mrf.mxu0
      %v899 = vadd.f32 0.0, %v898
      %900 = vmatmul.f32.gmra.mxu0 %v855
      %v901 = vpop.f32.mrf.mxu0
      %v902 = vadd.f32 0.0, %v901
      %903 = vmatmul.f32.gmra.mxu0 %v858
      %v904 = vpop.f32.mrf.mxu0
      %v905 = vadd.f32 0.0, %v904
      %906 = vmatmul.f32.gmra.mxu0 %v861
      %v907 = vpop.f32.mrf.mxu0
      %v908 = vadd.f32 0.0, %v907
      %909 = vmatmul.f32.gmra.mxu0 %v864
      %v910 = vpop.f32.mrf.mxu0
      %v911 = vadd.f32 0.0, %v910
      %912 = vdwg.mxu0
      %v913 = vadd.f32 %v795, %v884
      %v914 = vadd.f32 %v798, %v887
      %v915 = vadd.f32 %v801, %v890
      %v916 = vadd.f32 %v804, %v893
      %v917 = vadd.f32 %v807, %v896
      %v918 = vadd.f32 %v810, %v899
      %v919 = vadd.f32 %v813, %v902
      %v920 = vadd.f32 %v816, %v905
      %v921 = vadd.f32 %v819, %v908
      %v922 = vadd.f32 %v822, %v911
      %v923 = vld [vmem:[%s273 + $0xa] sm:$0xff]
      %v924 = vld [vmem:[%s273 + $0x12] sm:$0xff]
      %v925 = vld [vmem:[%s273 + $0x1a] sm:$0xff]
      %v926 = vld [vmem:[%s273 + $0x22] sm:$0xff]
      %v927 = vld [vmem:[%s273 + $0x2a] sm:$0xff]
      %v928 = vld [vmem:[%s273 + $0x32] sm:$0xff]
      %v929 = vld [vmem:[%s273 + $0x3a] sm:$0xff]
      %v930 = vld [vmem:[%s273 + $0x42] sm:$0xff]
      %v931 = vld [vmem:[%s273 + $0x4a] sm:$0xff]
      %v932 = vld [vmem:[%s273 + $0x52] sm:$0xff]
      %s933 = scalar_lea.vmem %s1, 24
      %v934 = vld [vmem:[%s933] sm:$0xff]
      %v936 = vsel %vm640, %v923, 0
      %v939 = vsel %vm640, %v924, 0
      %v942 = vsel %vm640, %v925, 0
      %v945 = vsel %vm640, %v926, 0
      %v948 = vsel %vm640, %v927, 0
      %v951 = vsel %vm640, %v928, 0
      %v954 = vsel %vm640, %v929, 0
      %v957 = vsel %vm640, %v930, 0
      %v960 = vsel %vm640, %v931, 0
      %v963 = vsel %vm640, %v932, 0
      %965 = vmatpush.msra.mxu0 0.0
      %966 = vmatpush.msra.mxu0 0.0
      %967 = vmatpush.msra.mxu0 0.0
      %968 = vmatpush.msra.mxu0 0.0
      %969 = vmatpush.msra.mxu0 0.0
      %970 = vmatpush.msra.mxu0 0.0
      %971 = vmatpush.msra.mxu0 0.0
      %972 = vmatpush.msra.mxu0 0.0
      %973 = vmatpush.msra.mxu0 0.0
      %974 = vmatpush.msra.mxu0 0.0
      %975 = vmatpush.msra.mxu0 0.0
      %976 = vmatpush.msra.mxu0 0.0
      %977 = vmatpush.msra.mxu0 0.0
      %978 = vmatpush.msra.mxu0 0.0
      %979 = vmatpush.msra.mxu0 0.0
      %980 = vmatpush.msra.mxu0 %v934
      %981 = vmatmul.f32.gmra.mxu0 %v936
      %v982 = vpop.f32.mrf.mxu0
      %v983 = vadd.f32 0.0, %v982
      %984 = vmatmul.f32.gmra.mxu0 %v939
      %v985 = vpop.f32.mrf.mxu0
      %v986 = vadd.f32 0.0, %v985
      %987 = vmatmul.f32.gmra.mxu0 %v942
      %v988 = vpop.f32.mrf.mxu0
      %v989 = vadd.f32 0.0, %v988
      %990 = vmatmul.f32.gmra.mxu0 %v945
      %v991 = vpop.f32.mrf.mxu0
      %v992 = vadd.f32 0.0, %v991
      %993 = vmatmul.f32.gmra.mxu0 %v948
      %v994 = vpop.f32.mrf.mxu0
      %v995 = vadd.f32 0.0, %v994
      %996 = vmatmul.f32.gmra.mxu0 %v951
      %v997 = vpop.f32.mrf.mxu0
      %v998 = vadd.f32 0.0, %v997
      %999 = vmatmul.f32.gmra.mxu0 %v954
      %v1000 = vpop.f32.mrf.mxu0
      %v1001 = vadd.f32 0.0, %v1000
      %1002 = vmatmul.f32.gmra.mxu0 %v957
      %v1003 = vpop.f32.mrf.mxu0
      %v1004 = vadd.f32 0.0, %v1003
      %1005 = vmatmul.f32.gmra.mxu0 %v960
      %v1006 = vpop.f32.mrf.mxu0
      %v1007 = vadd.f32 0.0, %v1006
      %1008 = vmatmul.f32.gmra.mxu0 %v963
      %v1009 = vpop.f32.mrf.mxu0
      %v1010 = vadd.f32 0.0, %v1009
      %1011 = vdwg.mxu0
      %v1012 = vadd.f32 %v913, %v983
      %v1013 = vadd.f32 %v914, %v986
      %v1014 = vadd.f32 %v915, %v989
      %v1015 = vadd.f32 %v916, %v992
      %v1016 = vadd.f32 %v917, %v995
      %v1017 = vadd.f32 %v918, %v998
      %v1018 = vadd.f32 %v919, %v1001
      %v1019 = vadd.f32 %v920, %v1004
      %v1020 = vadd.f32 %v921, %v1007
      %v1021 = vadd.f32 %v922, %v1010
      %v1022 = vld [vmem:[%s273 + $0xb] sm:$0xff]
      %v1023 = vld [vmem:[%s273 + $0x13] sm:$0xff]
      %v1024 = vld [vmem:[%s273 + $0x1b] sm:$0xff]
      %v1025 = vld [vmem:[%s273 + $0x23] sm:$0xff]
      %v1026 = vld [vmem:[%s273 + $0x2b] sm:$0xff]
      %v1027 = vld [vmem:[%s273 + $0x33] sm:$0xff]
      %v1028 = vld [vmem:[%s273 + $0x3b] sm:$0xff]
      %v1029 = vld [vmem:[%s273 + $0x43] sm:$0xff]
      %v1030 = vld [vmem:[%s273 + $0x4b] sm:$0xff]
      %v1031 = vld [vmem:[%s273 + $0x53] sm:$0xff]
      %s1032 = scalar_lea.vmem %s1, 32
      %v1033 = vld [vmem:[%s1032] sm:$0xff]
      %v1035 = vsel %vm640, %v1022, 0
      %v1038 = vsel %vm640, %v1023, 0
      %v1041 = vsel %vm640, %v1024, 0
      %v1044 = vsel %vm640, %v1025, 0
      %v1047 = vsel %vm640, %v1026, 0
      %v1050 = vsel %vm640, %v1027, 0
      %v1053 = vsel %vm640, %v1028, 0
      %v1056 = vsel %vm640, %v1029, 0
      %v1059 = vsel %vm640, %v1030, 0
      %v1062 = vsel %vm640, %v1031, 0
      %1064 = vmatpush.msra.mxu0 0.0
      %1065 = vmatpush.msra.mxu0 0.0
      %1066 = vmatpush.msra.mxu0 0.0
      %1067 = vmatpush.msra.mxu0 0.0
      %1068 = vmatpush.msra.mxu0 0.0
      %1069 = vmatpush.msra.mxu0 0.0
      %1070 = vmatpush.msra.mxu0 0.0
      %1071 = vmatpush.msra.mxu0 0.0
      %1072 = vmatpush.msra.mxu0 0.0
      %1073 = vmatpush.msra.mxu0 0.0
      %1074 = vmatpush.msra.mxu0 0.0
      %1075 = vmatpush.msra.mxu0 0.0
      %1076 = vmatpush.msra.mxu0 0.0
      %1077 = vmatpush.msra.mxu0 0.0
      %1078 = vmatpush.msra.mxu0 0.0
      %1079 = vmatpush.msra.mxu0 %v1033
      %1080 = vmatmul.f32.gmra.mxu0 %v1035
      %v1081 = vpop.f32.mrf.mxu0
      %v1082 = vadd.f32 0.0, %v1081
      %1083 = vmatmul.f32.gmra.mxu0 %v1038
      %v1084 = vpop.f32.mrf.mxu0
      %v1085 = vadd.f32 0.0, %v1084
      %1086 = vmatmul.f32.gmra.mxu0 %v1041
      %v1087 = vpop.f32.mrf.mxu0
      %v1088 = vadd.f32 0.0, %v1087
      %1089 = vmatmul.f32.gmra.mxu0 %v1044
      %v1090 = vpop.f32.mrf.mxu0
      %v1091 = vadd.f32 0.0, %v1090
      %1092 = vmatmul.f32.gmra.mxu0 %v1047
      %v1093 = vpop.f32.mrf.mxu0
      %v1094 = vadd.f32 0.0, %v1093
      %1095 = vmatmul.f32.gmra.mxu0 %v1050
      %v1096 = vpop.f32.mrf.mxu0
      %v1097 = vadd.f32 0.0, %v1096
      %1098 = vmatmul.f32.gmra.mxu0 %v1053
      %v1099 = vpop.f32.mrf.mxu0
      %v1100 = vadd.f32 0.0, %v1099
      %1101 = vmatmul.f32.gmra.mxu0 %v1056
      %v1102 = vpop.f32.mrf.mxu0
      %v1103 = vadd.f32 0.0, %v1102
      %1104 = vmatmul.f32.gmra.mxu0 %v1059
      %v1105 = vpop.f32.mrf.mxu0
      %v1106 = vadd.f32 0.0, %v1105
      %1107 = vmatmul.f32.gmra.mxu0 %v1062
      %v1108 = vpop.f32.mrf.mxu0
      %v1109 = vadd.f32 0.0, %v1108
      %1110 = vdwg.mxu0
      %v1111 = vadd.f32 %v1012, %v1082
      %v1112 = vadd.f32 %v1013, %v1085
      %v1113 = vadd.f32 %v1014, %v1088
      %v1114 = vadd.f32 %v1015, %v1091
      %v1115 = vadd.f32 %v1016, %v1094
      %v1116 = vadd.f32 %v1017, %v1097
      %v1117 = vadd.f32 %v1018, %v1100
      %v1118 = vadd.f32 %v1019, %v1103
      %v1119 = vadd.f32 %v1020, %v1106
      %v1120 = vadd.f32 %v1021, %v1109
      %v1121 = vld [vmem:[%s273 + $0xc] sm:$0xff]
      %v1122 = vld [vmem:[%s273 + $0x14] sm:$0xff]
      %v1123 = vld [vmem:[%s273 + $0x1c] sm:$0xff]
      %v1124 = vld [vmem:[%s273 + $0x24] sm:$0xff]
      %v1125 = vld [vmem:[%s273 + $0x2c] sm:$0xff]
      %v1126 = vld [vmem:[%s273 + $0x34] sm:$0xff]
      %v1127 = vld [vmem:[%s273 + $0x3c] sm:$0xff]
      %v1128 = vld [vmem:[%s273 + $0x44] sm:$0xff]
      %v1129 = vld [vmem:[%s273 + $0x4c] sm:$0xff]
      %v1130 = vld [vmem:[%s273 + $0x54] sm:$0xff]
      %s1131 = scalar_lea.vmem %s1, 40
      %v1132 = vld [vmem:[%s1131] sm:$0xff]
      %v1134 = vsel %vm640, %v1121, 0
      %v1137 = vsel %vm640, %v1122, 0
      %v1140 = vsel %vm640, %v1123, 0
      %v1143 = vsel %vm640, %v1124, 0
      %v1146 = vsel %vm640, %v1125, 0
      %v1149 = vsel %vm640, %v1126, 0
      %v1152 = vsel %vm640, %v1127, 0
      %v1155 = vsel %vm640, %v1128, 0
      %v1158 = vsel %vm640, %v1129, 0
      %v1161 = vsel %vm640, %v1130, 0
      %1163 = vmatpush.msra.mxu0 0.0
      %1164 = vmatpush.msra.mxu0 0.0
      %1165 = vmatpush.msra.mxu0 0.0
      %1166 = vmatpush.msra.mxu0 0.0
      %1167 = vmatpush.msra.mxu0 0.0
      %1168 = vmatpush.msra.mxu0 0.0
      %1169 = vmatpush.msra.mxu0 0.0
      %1170 = vmatpush.msra.mxu0 0.0
      %1171 = vmatpush.msra.mxu0 0.0
      %1172 = vmatpush.msra.mxu0 0.0
      %1173 = vmatpush.msra.mxu0 0.0
      %1174 = vmatpush.msra.mxu0 0.0
      %1175 = vmatpush.msra.mxu0 0.0
      %1176 = vmatpush.msra.mxu0 0.0
      %1177 = vmatpush.msra.mxu0 0.0
      %1178 = vmatpush.msra.mxu0 %v1132
      %1179 = vmatmul.f32.gmra.mxu0 %v1134
      %v1180 = vpop.f32.mrf.mxu0
      %v1181 = vadd.f32 0.0, %v1180
      %1182 = vmatmul.f32.gmra.mxu0 %v1137
      %v1183 = vpop.f32.mrf.mxu0
      %v1184 = vadd.f32 0.0, %v1183
      %1185 = vmatmul.f32.gmra.mxu0 %v1140
      %v1186 = vpop.f32.mrf.mxu0
      %v1187 = vadd.f32 0.0, %v1186
      %1188 = vmatmul.f32.gmra.mxu0 %v1143
      %v1189 = vpop.f32.mrf.mxu0
      %v1190 = vadd.f32 0.0, %v1189
      %1191 = vmatmul.f32.gmra.mxu0 %v1146
      %v1192 = vpop.f32.mrf.mxu0
      %v1193 = vadd.f32 0.0, %v1192
      %1194 = vmatmul.f32.gmra.mxu0 %v1149
      %v1195 = vpop.f32.mrf.mxu0
      %v1196 = vadd.f32 0.0, %v1195
      %1197 = vmatmul.f32.gmra.mxu0 %v1152
      %v1198 = vpop.f32.mrf.mxu0
      %v1199 = vadd.f32 0.0, %v1198
      %1200 = vmatmul.f32.gmra.mxu0 %v1155
      %v1201 = vpop.f32.mrf.mxu0
      %v1202 = vadd.f32 0.0, %v1201
      %1203 = vmatmul.f32.gmra.mxu0 %v1158
      %v1204 = vpop.f32.mrf.mxu0
      %v1205 = vadd.f32 0.0, %v1204
      %1206 = vmatmul.f32.gmra.mxu0 %v1161
      %v1207 = vpop.f32.mrf.mxu0
      %v1208 = vadd.f32 0.0, %v1207
      %1209 = vdwg.mxu0
      %v1210 = vadd.f32 %v1111, %v1181
      %v1211 = vadd.f32 %v1112, %v1184
      %v1212 = vadd.f32 %v1113, %v1187
      %v1213 = vadd.f32 %v1114, %v1190
      %v1214 = vadd.f32 %v1115, %v1193
      %v1215 = vadd.f32 %v1116, %v1196
      %v1216 = vadd.f32 %v1117, %v1199
      %v1217 = vadd.f32 %v1118, %v1202
      %v1218 = vadd.f32 %v1119, %v1205
      %v1219 = vadd.f32 %v1120, %v1208
      %v1220 = vld [vmem:[%s273 + $0x14] sm:$0xff]
      %v1221 = vld [vmem:[%s273 + $0x1c] sm:$0xff]
      %v1222 = vld [vmem:[%s273 + $0x24] sm:$0xff]
      %v1223 = vld [vmem:[%s273 + $0x2c] sm:$0xff]
      %v1224 = vld [vmem:[%s273 + $0x34] sm:$0xff]
      %v1225 = vld [vmem:[%s273 + $0x3c] sm:$0xff]
      %v1226 = vld [vmem:[%s273 + $0x44] sm:$0xff]
      %v1227 = vld [vmem:[%s273 + $0x4c] sm:$0xff]
      %v1228 = vld [vmem:[%s273 + $0x54] sm:$0xff]
      %v1229 = vld [vmem:[%s273 + $0x5c] sm:$0xff]
      %s1230 = scalar_lea.vmem %s1, 48
      %v1231 = vld [vmem:[%s1230] sm:$0xff]
      %v1233 = vsel %vm640, %v1220, 0
      %v1236 = vsel %vm640, %v1221, 0
      %v1239 = vsel %vm640, %v1222, 0
      %v1242 = vsel %vm640, %v1223, 0
      %v1245 = vsel %vm640, %v1224, 0
      %v1248 = vsel %vm640, %v1225, 0
      %v1251 = vsel %vm640, %v1226, 0
      %v1254 = vsel %vm640, %v1227, 0
      %v1257 = vsel %vm640, %v1228, 0
      %v1260 = vsel %vm640, %v1229, 0
      %1262 = vmatpush.msra.mxu0 0.0
      %1263 = vmatpush.msra.mxu0 0.0
      %1264 = vmatpush.msra.mxu0 0.0
      %1265 = vmatpush.msra.mxu0 0.0
      %1266 = vmatpush.msra.mxu0 0.0
      %1267 = vmatpush.msra.mxu0 0.0
      %1268 = vmatpush.msra.mxu0 0.0
      %1269 = vmatpush.msra.mxu0 0.0
      %1270 = vmatpush.msra.mxu0 0.0
      %1271 = vmatpush.msra.mxu0 0.0
      %1272 = vmatpush.msra.mxu0 0.0
      %1273 = vmatpush.msra.mxu0 0.0
      %1274 = vmatpush.msra.mxu0 0.0
      %1275 = vmatpush.msra.mxu0 0.0
      %1276 = vmatpush.msra.mxu0 0.0
      %1277 = vmatpush.msra.mxu0 %v1231
      %1278 = vmatmul.f32.gmra.mxu0 %v1233
      %v1279 = vpop.f32.mrf.mxu0
      %v1280 = vadd.f32 0.0, %v1279
      %1281 = vmatmul.f32.gmra.mxu0 %v1236
      %v1282 = vpop.f32.mrf.mxu0
      %v1283 = vadd.f32 0.0, %v1282
      %1284 = vmatmul.f32.gmra.mxu0 %v1239
      %v1285 = vpop.f32.mrf.mxu0
      %v1286 = vadd.f32 0.0, %v1285
      %1287 = vmatmul.f32.gmra.mxu0 %v1242
      %v1288 = vpop.f32.mrf.mxu0
      %v1289 = vadd.f32 0.0, %v1288
      %1290 = vmatmul.f32.gmra.mxu0 %v1245
      %v1291 = vpop.f32.mrf.mxu0
      %v1292 = vadd.f32 0.0, %v1291
      %1293 = vmatmul.f32.gmra.mxu0 %v1248
      %v1294 = vpop.f32.mrf.mxu0
      %v1295 = vadd.f32 0.0, %v1294
      %1296 = vmatmul.f32.gmra.mxu0 %v1251
      %v1297 = vpop.f32.mrf.mxu0
      %v1298 = vadd.f32 0.0, %v1297
      %1299 = vmatmul.f32.gmra.mxu0 %v1254
      %v1300 = vpop.f32.mrf.mxu0
      %v1301 = vadd.f32 0.0, %v1300
      %1302 = vmatmul.f32.gmra.mxu0 %v1257
      %v1303 = vpop.f32.mrf.mxu0
      %v1304 = vadd.f32 0.0, %v1303
      %1305 = vmatmul.f32.gmra.mxu0 %v1260
      %v1306 = vpop.f32.mrf.mxu0
      %v1307 = vadd.f32 0.0, %v1306
      %1308 = vdwg.mxu0
      %v1309 = vadd.f32 %v1210, %v1280
      %v1310 = vadd.f32 %v1211, %v1283
      %v1311 = vadd.f32 %v1212, %v1286
      %v1312 = vadd.f32 %v1213, %v1289
      %v1313 = vadd.f32 %v1214, %v1292
      %v1314 = vadd.f32 %v1215, %v1295
      %v1315 = vadd.f32 %v1216, %v1298
      %v1316 = vadd.f32 %v1217, %v1301
      %v1317 = vadd.f32 %v1218, %v1304
      %v1318 = vadd.f32 %v1219, %v1307
      %v1319 = vld [vmem:[%s273 + $0x15] sm:$0xff]
      %v1320 = vld [vmem:[%s273 + $0x1d] sm:$0xff]
      %v1321 = vld [vmem:[%s273 + $0x25] sm:$0xff]
      %v1322 = vld [vmem:[%s273 + $0x2d] sm:$0xff]
      %v1323 = vld [vmem:[%s273 + $0x35] sm:$0xff]
      %v1324 = vld [vmem:[%s273 + $0x3d] sm:$0xff]
      %v1325 = vld [vmem:[%s273 + $0x45] sm:$0xff]
      %v1326 = vld [vmem:[%s273 + $0x4d] sm:$0xff]
      %v1327 = vld [vmem:[%s273 + $0x55] sm:$0xff]
      %v1328 = vld [vmem:[%s273 + $0x5d] sm:$0xff]
      %s1329 = scalar_lea.vmem %s1, 56
      %v1330 = vld [vmem:[%s1329] sm:$0xff]
      %v1332 = vsel %vm640, %v1319, 0
      %v1335 = vsel %vm640, %v1320, 0
      %v1338 = vsel %vm640, %v1321, 0
      %v1341 = vsel %vm640, %v1322, 0
      %v1344 = vsel %vm640, %v1323, 0
      %v1347 = vsel %vm640, %v1324, 0
      %v1350 = vsel %vm640, %v1325, 0
      %v1353 = vsel %vm640, %v1326, 0
      %v1356 = vsel %vm640, %v1327, 0
      %v1359 = vsel %vm640, %v1328, 0
      %1361 = vmatpush.msra.mxu0 0.0
      %1362 = vmatpush.msra.mxu0 0.0
      %1363 = vmatpush.msra.mxu0 0.0
      %1364 = vmatpush.msra.mxu0 0.0
      %1365 = vmatpush.msra.mxu0 0.0
      %1366 = vmatpush.msra.mxu0 0.0
      %1367 = vmatpush.msra.mxu0 0.0
      %1368 = vmatpush.msra.mxu0 0.0
      %1369 = vmatpush.msra.mxu0 0.0
      %1370 = vmatpush.msra.mxu0 0.0
      %1371 = vmatpush.msra.mxu0 0.0
      %1372 = vmatpush.msra.mxu0 0.0
      %1373 = vmatpush.msra.mxu0 0.0
      %1374 = vmatpush.msra.mxu0 0.0
      %1375 = vmatpush.msra.mxu0 0.0
      %1376 = vmatpush.msra.mxu0 %v1330
      %1377 = vmatmul.f32.gmra.mxu0 %v1332
      %v1378 = vpop.f32.mrf.mxu0
      %v1379 = vadd.f32 0.0, %v1378
      %1380 = vmatmul.f32.gmra.mxu0 %v1335
      %v1381 = vpop.f32.mrf.mxu0
      %v1382 = vadd.f32 0.0, %v1381
      %1383 = vmatmul.f32.gmra.mxu0 %v1338
      %v1384 = vpop.f32.mrf.mxu0
      %v1385 = vadd.f32 0.0, %v1384
      %1386 = vmatmul.f32.gmra.mxu0 %v1341
      %v1387 = vpop.f32.mrf.mxu0
      %v1388 = vadd.f32 0.0, %v1387
      %1389 = vmatmul.f32.gmra.mxu0 %v1344
      %v1390 = vpop.f32.mrf.mxu0
      %v1391 = vadd.f32 0.0, %v1390
      %1392 = vmatmul.f32.gmra.mxu0 %v1347
      %v1393 = vpop.f32.mrf.mxu0
      %v1394 = vadd.f32 0.0, %v1393
      %1395 = vmatmul.f32.gmra.mxu0 %v1350
      %v1396 = vpop.f32.mrf.mxu0
      %v1397 = vadd.f32 0.0, %v1396
      %1398 = vmatmul.f32.gmra.mxu0 %v1353
      %v1399 = vpop.f32.mrf.mxu0
      %v1400 = vadd.f32 0.0, %v1399
      %1401 = vmatmul.f32.gmra.mxu0 %v1356
      %v1402 = vpop.f32.mrf.mxu0
      %v1403 = vadd.f32 0.0, %v1402
      %1404 = vmatmul.f32.gmra.mxu0 %v1359
      %v1405 = vpop.f32.mrf.mxu0
      %v1406 = vadd.f32 0.0, %v1405
      %1407 = vdwg.mxu0
      %v1408 = vadd.f32 %v1309, %v1379
      %v1409 = vadd.f32 %v1310, %v1382
      %v1410 = vadd.f32 %v1311, %v1385
      %v1411 = vadd.f32 %v1312, %v1388
      %v1412 = vadd.f32 %v1313, %v1391
      %v1413 = vadd.f32 %v1314, %v1394
      %v1414 = vadd.f32 %v1315, %v1397
      %v1415 = vadd.f32 %v1316, %v1400
      %v1416 = vadd.f32 %v1317, %v1403
      %v1417 = vadd.f32 %v1318, %v1406
      %v1418 = vld [vmem:[%s273 + $0x16] sm:$0xff]
      %v1419 = vld [vmem:[%s273 + $0x1e] sm:$0xff]
      %v1420 = vld [vmem:[%s273 + $0x26] sm:$0xff]
      %v1421 = vld [vmem:[%s273 + $0x2e] sm:$0xff]
      %v1422 = vld [vmem:[%s273 + $0x36] sm:$0xff]
      %v1423 = vld [vmem:[%s273 + $0x3e] sm:$0xff]
      %v1424 = vld [vmem:[%s273 + $0x46] sm:$0xff]
      %v1425 = vld [vmem:[%s273 + $0x4e] sm:$0xff]
      %v1426 = vld [vmem:[%s273 + $0x56] sm:$0xff]
      %v1427 = vld [vmem:[%s273 + $0x5e] sm:$0xff]
      %s1428 = scalar_lea.vmem %s1, 64
      %v1429 = vld [vmem:[%s1428] sm:$0xff]
      %v1431 = vsel %vm640, %v1418, 0
      %v1434 = vsel %vm640, %v1419, 0
      %v1437 = vsel %vm640, %v1420, 0
      %v1440 = vsel %vm640, %v1421, 0
      %v1443 = vsel %vm640, %v1422, 0
      %v1446 = vsel %vm640, %v1423, 0
      %v1449 = vsel %vm640, %v1424, 0
      %v1452 = vsel %vm640, %v1425, 0
      %v1455 = vsel %vm640, %v1426, 0
      %v1458 = vsel %vm640, %v1427, 0
      %1460 = vmatpush.msra.mxu0 0.0
      %1461 = vmatpush.msra.mxu0 0.0
      %1462 = vmatpush.msra.mxu0 0.0
      %1463 = vmatpush.msra.mxu0 0.0
      %1464 = vmatpush.msra.mxu0 0.0
      %1465 = vmatpush.msra.mxu0 0.0
      %1466 = vmatpush.msra.mxu0 0.0
      %1467 = vmatpush.msra.mxu0 0.0
      %1468 = vmatpush.msra.mxu0 0.0
      %1469 = vmatpush.msra.mxu0 0.0
      %1470 = vmatpush.msra.mxu0 0.0
      %1471 = vmatpush.msra.mxu0 0.0
      %1472 = vmatpush.msra.mxu0 0.0
      %1473 = vmatpush.msra.mxu0 0.0
      %1474 = vmatpush.msra.mxu0 0.0
      %1475 = vmatpush.msra.mxu0 %v1429
      %1476 = vmatmul.f32.gmra.mxu0 %v1431
      %v1477 = vpop.f32.mrf.mxu0
      %v1478 = vadd.f32 0.0, %v1477
      %1479 = vmatmul.f32.gmra.mxu0 %v1434
      %v1480 = vpop.f32.mrf.mxu0
      %v1481 = vadd.f32 0.0, %v1480
      %1482 = vmatmul.f32.gmra.mxu0 %v1437
      %v1483 = vpop.f32.mrf.mxu0
      %v1484 = vadd.f32 0.0, %v1483
      %1485 = vmatmul.f32.gmra.mxu0 %v1440
      %v1486 = vpop.f32.mrf.mxu0
      %v1487 = vadd.f32 0.0, %v1486
      %1488 = vmatmul.f32.gmra.mxu0 %v1443
      %v1489 = vpop.f32.mrf.mxu0
      %v1490 = vadd.f32 0.0, %v1489
      %1491 = vmatmul.f32.gmra.mxu0 %v1446
      %v1492 = vpop.f32.mrf.mxu0
      %v1493 = vadd.f32 0.0, %v1492
      %1494 = vmatmul.f32.gmra.mxu0 %v1449
      %v1495 = vpop.f32.mrf.mxu0
      %v1496 = vadd.f32 0.0, %v1495
      %1497 = vmatmul.f32.gmra.mxu0 %v1452
      %v1498 = vpop.f32.mrf.mxu0
      %v1499 = vadd.f32 0.0, %v1498
      %1500 = vmatmul.f32.gmra.mxu0 %v1455
      %v1501 = vpop.f32.mrf.mxu0
      %v1502 = vadd.f32 0.0, %v1501
      %1503 = vmatmul.f32.gmra.mxu0 %v1458
      %v1504 = vpop.f32.mrf.mxu0
      %v1505 = vadd.f32 0.0, %v1504
      %1506 = vdwg.mxu0
      %v1507 = vadd.f32 %v1408, %v1478
      %v1508 = vadd.f32 %v1409, %v1481
      %v1509 = vadd.f32 %v1410, %v1484
      %v1510 = vadd.f32 %v1411, %v1487
      %v1511 = vadd.f32 %v1412, %v1490
      %v1512 = vadd.f32 %v1413, %v1493
      %v1513 = vadd.f32 %v1414, %v1496
      %v1514 = vadd.f32 %v1415, %v1499
      %v1515 = vadd.f32 %v1416, %v1502
      %v1516 = vadd.f32 %v1417, %v1505
      %v1517 = vld [vmem:[%s2] sm:$0x1]
      %v1519 = vperm.slane %v1517, 0
      %v1521 = vmul.f32 %v1507, %v1519
      %v1522 = vmul.f32 %v1508, %v1519
      %v1523 = vmul.f32 %v1509, %v1519
      %v1524 = vmul.f32 %v1510, %v1519
      %v1525 = vmul.f32 %v1511, %v1519
      %v1526 = vmul.f32 %v1512, %v1519
      %v1527 = vmul.f32 %v1513, %v1519
      %v1528 = vmul.f32 %v1514, %v1519
      %v1529 = vmul.f32 %v1515, %v1519
      %v1530 = vmul.f32 %v1516, %v1519
      %v1531 = vld [vmem:[%s3] sm:$0x1]
      %v1533 = vperm.slane %v1531, 0
      %v1535 = vadd.f32 %v1521, %v1533
      %v1536 = vadd.f32 %v1522, %v1533
      %v1537 = vadd.f32 %v1523, %v1533
      %v1538 = vadd.f32 %v1524, %v1533
      %v1539 = vadd.f32 %v1525, %v1533
      %v1540 = vadd.f32 %v1526, %v1533
      %v1541 = vadd.f32 %v1527, %v1533
      %v1542 = vadd.f32 %v1528, %v1533
      %v1543 = vadd.f32 %v1529, %v1533
      %v1544 = vadd.f32 %v1530, %v1533
      %v1545 = vmax.f32 %v1535, 0.0
      %v1546 = vmax.f32 %v1536, 0.0
      %v1547 = vmax.f32 %v1537, 0.0
      %v1548 = vmax.f32 %v1538, 0.0
      %v1549 = vmax.f32 %v1539, 0.0
      %v1550 = vmax.f32 %v1540, 0.0
      %v1551 = vmax.f32 %v1541, 0.0
      %v1552 = vmax.f32 %v1542, 0.0
      %v1553 = vmax.f32 %v1543, 0.0
      %v1554 = vmax.f32 %v1544, 0.0
      %v1555 = vsel %vm630, %v1545, 0.0
      %v1556 = vsel %vm631, %v1546, 0.0
      %v1557 = vsel %vm632, %v1547, 0.0
      %v1558 = vsel %vm633, %v1548, 0.0
      %v1559 = vsel %vm634, %v1549, 0.0
      %v1560 = vsel %vm635, %v1550, 0.0
      %v1561 = vsel %vm636, %v1551, 0.0
      %v1562 = vsel %vm637, %v1552, 0.0
      %v1563 = vsel %vm638, %v1553, 0.0
      %v1564 = vsel %vm639, %v1554, 0.0
      %1565 = vst.msk [vmem:[#allocation2 + $0xb] sm:$0xff] %vm640, %v1555
      %1566 = vst.msk [vmem:[#allocation2 + $0x13] sm:$0xff] %vm640, %v1556
      %1567 = vst.msk [vmem:[#allocation2 + $0x1b] sm:$0xff] %vm640, %v1557
      %1568 = vst.msk [vmem:[#allocation2 + $0x23] sm:$0xff] %vm640, %v1558
      %1569 = vst.msk [vmem:[#allocation2 + $0x2b] sm:$0xff] %vm640, %v1559
      %1570 = vst.msk [vmem:[#allocation2 + $0x33] sm:$0xff] %vm640, %v1560
      %1571 = vst.msk [vmem:[#allocation2 + $0x3b] sm:$0xff] %vm640, %v1561
      %1572 = vst.msk [vmem:[#allocation2 + $0x43] sm:$0xff] %vm640, %v1562
      %1573 = vst.msk [vmem:[#allocation2 + $0x4b] sm:$0xff] %vm640, %v1563
      %1574 = vst.msk [vmem:[#allocation2 + $0x53] sm:$0xff] %vm640, %v1564
      %v1575 = vld [vmem:[#allocation2] sm:$0xff]
      %v1576 = vld [vmem:[#allocation2 + $0x8] sm:$0xff]
      %v1577 = vld [vmem:[#allocation2 + $0x10] sm:$0xff]
      %v1578 = vld [vmem:[#allocation2 + $0x18] sm:$0xff]
      %v1579 = vld [vmem:[#allocation2 + $0x20] sm:$0xff]
      %v1580 = vld [vmem:[#allocation2 + $0x28] sm:$0xff]
      %v1581 = vld [vmem:[#allocation2 + $0x30] sm:$0xff]
      %v1582 = vld [vmem:[#allocation2 + $0x38] sm:$0xff]
      %v1583 = vld [vmem:[#allocation2 + $0x40] sm:$0xff]
      %v1584 = vld [vmem:[#allocation2 + $0x48] sm:$0xff]
      %v1585 = vld [vmem:[%s4] sm:$0xff]
      %v1586 = vld [vmem:[#allocation2 + $0x1] sm:$0xff]
      %v1587 = vld [vmem:[#allocation2 + $0x9] sm:$0xff]
      %v1588 = vld [vmem:[#allocation2 + $0x11] sm:$0xff]
      %v1589 = vld [vmem:[#allocation2 + $0x19] sm:$0xff]
      %v1590 = vld [vmem:[#allocation2 + $0x21] sm:$0xff]
      %v1591 = vld [vmem:[#allocation2 + $0x29] sm:$0xff]
      %v1592 = vld [vmem:[#allocation2 + $0x31] sm:$0xff]
      %v1593 = vld [vmem:[#allocation2 + $0x39] sm:$0xff]
      %v1594 = vld [vmem:[#allocation2 + $0x41] sm:$0xff]
      %v1595 = vld [vmem:[#allocation2 + $0x49] sm:$0xff]
      %s1596 = scalar_lea.vmem %s4, 8
      %v1597 = vld [vmem:[%s1596] sm:$0xff]
      %v1599 = vsel %vm640, %v1586, 0
      %v1602 = vsel %vm640, %v1587, 0
      %v1605 = vsel %vm640, %v1588, 0
      %v1608 = vsel %vm640, %v1589, 0
      %v1611 = vsel %vm640, %v1590, 0
      %v1614 = vsel %vm640, %v1591, 0
      %v1617 = vsel %vm640, %v1592, 0
      %v1620 = vsel %vm640, %v1593, 0
      %v1623 = vsel %vm640, %v1594, 0
      %v1626 = vsel %vm640, %v1595, 0
      %1628 = vmatpush.msra.mxu0 0.0
      %1629 = vmatpush.msra.mxu0 0.0
      %1630 = vmatpush.msra.mxu0 0.0
      %1631 = vmatpush.msra.mxu0 0.0
      %1632 = vmatpush.msra.mxu0 0.0
      %1633 = vmatpush.msra.mxu0 0.0
      %1634 = vmatpush.msra.mxu0 0.0
      %1635 = vmatpush.msra.mxu0 0.0
      %1636 = vmatpush.msra.mxu0 0.0
      %1637 = vmatpush.msra.mxu0 0.0
      %1638 = vmatpush.msra.mxu0 0.0
      %1639 = vmatpush.msra.mxu0 0.0
      %1640 = vmatpush.msra.mxu0 0.0
      %1641 = vmatpush.msra.mxu0 0.0
      %1642 = vmatpush.msra.mxu0 0.0
      %1643 = vmatpush.msra.mxu0 %v1597
      %1644 = vmatmul.f32.gmra.mxu0 %v1599
      %v1645 = vpop.f32.mrf.mxu0
      %v1646 = vadd.f32 0.0, %v1645
      %1647 = vmatmul.f32.gmra.mxu0 %v1602
      %v1648 = vpop.f32.mrf.mxu0
      %v1649 = vadd.f32 0.0, %v1648
      %1650 = vmatmul.f32.gmra.mxu0 %v1605
      %v1651 = vpop.f32.mrf.mxu0
      %v1652 = vadd.f32 0.0, %v1651
      %1653 = vmatmul.f32.gmra.mxu0 %v1608
      %v1654 = vpop.f32.mrf.mxu0
      %v1655 = vadd.f32 0.0, %v1654
      %1656 = vmatmul.f32.gmra.mxu0 %v1611
      %v1657 = vpop.f32.mrf.mxu0
      %v1658 = vadd.f32 0.0, %v1657
      %1659 = vmatmul.f32.gmra.mxu0 %v1614
      %v1660 = vpop.f32.mrf.mxu0
      %v1661 = vadd.f32 0.0, %v1660
      %1662 = vmatmul.f32.gmra.mxu0 %v1617
      %v1663 = vpop.f32.mrf.mxu0
      %v1664 = vadd.f32 0.0, %v1663
      %1665 = vmatmul.f32.gmra.mxu0 %v1620
      %v1666 = vpop.f32.mrf.mxu0
      %v1667 = vadd.f32 0.0, %v1666
      %1668 = vmatmul.f32.gmra.mxu0 %v1623
      %v1669 = vpop.f32.mrf.mxu0
      %v1670 = vadd.f32 0.0, %v1669
      %1671 = vmatmul.f32.gmra.mxu0 %v1626
      %v1672 = vpop.f32.mrf.mxu0
      %v1673 = vadd.f32 0.0, %v1672
      %1674 = vdwg.mxu0
      %v1676 = vsel %vm640, %v1575, 0
      %v1679 = vsel %vm640, %v1576, 0
      %v1682 = vsel %vm640, %v1577, 0
      %v1685 = vsel %vm640, %v1578, 0
      %v1688 = vsel %vm640, %v1579, 0
      %v1691 = vsel %vm640, %v1580, 0
      %v1694 = vsel %vm640, %v1581, 0
      %v1697 = vsel %vm640, %v1582, 0
      %v1700 = vsel %vm640, %v1583, 0
      %v1703 = vsel %vm640, %v1584, 0
      %1705 = vmatpush.msra.mxu0 0.0
      %1706 = vmatpush.msra.mxu0 0.0
      %1707 = vmatpush.msra.mxu0 0.0
      %1708 = vmatpush.msra.mxu0 0.0
      %1709 = vmatpush.msra.mxu0 0.0
      %1710 = vmatpush.msra.mxu0 0.0
      %1711 = vmatpush.msra.mxu0 0.0
      %1712 = vmatpush.msra.mxu0 0.0
      %1713 = vmatpush.msra.mxu0 0.0
      %1714 = vmatpush.msra.mxu0 0.0
      %1715 = vmatpush.msra.mxu0 0.0
      %1716 = vmatpush.msra.mxu0 0.0
      %1717 = vmatpush.msra.mxu0 0.0
      %1718 = vmatpush.msra.mxu0 0.0
      %1719 = vmatpush.msra.mxu0 0.0
      %1720 = vmatpush.msra.mxu0 %v1585
      %1721 = vmatmul.f32.gmra.mxu0 %v1676
      %v1722 = vpop.f32.mrf.mxu0
      %v1723 = vadd.f32 %v1646, %v1722
      %1724 = vmatmul.f32.gmra.mxu0 %v1679
      %v1725 = vpop.f32.mrf.mxu0
      %v1726 = vadd.f32 %v1649, %v1725
      %1727 = vmatmul.f32.gmra.mxu0 %v1682
      %v1728 = vpop.f32.mrf.mxu0
      %v1729 = vadd.f32 %v1652, %v1728
      %1730 = vmatmul.f32.gmra.mxu0 %v1685
      %v1731 = vpop.f32.mrf.mxu0
      %v1732 = vadd.f32 %v1655, %v1731
      %1733 = vmatmul.f32.gmra.mxu0 %v1688
      %v1734 = vpop.f32.mrf.mxu0
      %v1735 = vadd.f32 %v1658, %v1734
      %1736 = vmatmul.f32.gmra.mxu0 %v1691
      %v1737 = vpop.f32.mrf.mxu0
      %v1738 = vadd.f32 %v1661, %v1737
      %1739 = vmatmul.f32.gmra.mxu0 %v1694
      %v1740 = vpop.f32.mrf.mxu0
      %v1741 = vadd.f32 %v1664, %v1740
      %1742 = vmatmul.f32.gmra.mxu0 %v1697
      %v1743 = vpop.f32.mrf.mxu0
      %v1744 = vadd.f32 %v1667, %v1743
      %1745 = vmatmul.f32.gmra.mxu0 %v1700
      %v1746 = vpop.f32.mrf.mxu0
      %v1747 = vadd.f32 %v1670, %v1746
      %1748 = vmatmul.f32.gmra.mxu0 %v1703
      %v1749 = vpop.f32.mrf.mxu0
      %v1750 = vadd.f32 %v1673, %v1749
      %1751 = vdwg.mxu0
      %v1752 = vld [vmem:[#allocation2 + $0x2] sm:$0xff]
      %v1753 = vld [vmem:[#allocation2 + $0xa] sm:$0xff]
      %v1754 = vld [vmem:[#allocation2 + $0x12] sm:$0xff]
      %v1755 = vld [vmem:[#allocation2 + $0x1a] sm:$0xff]
      %v1756 = vld [vmem:[#allocation2 + $0x22] sm:$0xff]
      %v1757 = vld [vmem:[#allocation2 + $0x2a] sm:$0xff]
      %v1758 = vld [vmem:[#allocation2 + $0x32] sm:$0xff]
      %v1759 = vld [vmem:[#allocation2 + $0x3a] sm:$0xff]
      %v1760 = vld [vmem:[#allocation2 + $0x42] sm:$0xff]
      %v1761 = vld [vmem:[#allocation2 + $0x4a] sm:$0xff]
      %s1762 = scalar_lea.vmem %s4, 16
      %v1763 = vld [vmem:[%s1762] sm:$0xff]
      %v1765 = vsel %vm640, %v1752, 0
      %v1768 = vsel %vm640, %v1753, 0
      %v1771 = vsel %vm640, %v1754, 0
      %v1774 = vsel %vm640, %v1755, 0
      %v1777 = vsel %vm640, %v1756, 0
      %v1780 = vsel %vm640, %v1757, 0
      %v1783 = vsel %vm640, %v1758, 0
      %v1786 = vsel %vm640, %v1759, 0
      %v1789 = vsel %vm640, %v1760, 0
      %v1792 = vsel %vm640, %v1761, 0
      %1794 = vmatpush.msra.mxu0 0.0
      %1795 = vmatpush.msra.mxu0 0.0
      %1796 = vmatpush.msra.mxu0 0.0
      %1797 = vmatpush.msra.mxu0 0.0
      %1798 = vmatpush.msra.mxu0 0.0
      %1799 = vmatpush.msra.mxu0 0.0
      %1800 = vmatpush.msra.mxu0 0.0
      %1801 = vmatpush.msra.mxu0 0.0
      %1802 = vmatpush.msra.mxu0 0.0
      %1803 = vmatpush.msra.mxu0 0.0
      %1804 = vmatpush.msra.mxu0 0.0
      %1805 = vmatpush.msra.mxu0 0.0
      %1806 = vmatpush.msra.mxu0 0.0
      %1807 = vmatpush.msra.mxu0 0.0
      %1808 = vmatpush.msra.mxu0 0.0
      %1809 = vmatpush.msra.mxu0 %v1763
      %1810 = vmatmul.f32.gmra.mxu0 %v1765
      %v1811 = vpop.f32.mrf.mxu0
      %v1812 = vadd.f32 0.0, %v1811
      %1813 = vmatmul.f32.gmra.mxu0 %v1768
      %v1814 = vpop.f32.mrf.mxu0
      %v1815 = vadd.f32 0.0, %v1814
      %1816 = vmatmul.f32.gmra.mxu0 %v1771
      %v1817 = vpop.f32.mrf.mxu0
      %v1818 = vadd.f32 0.0, %v1817
      %1819 = vmatmul.f32.gmra.mxu0 %v1774
      %v1820 = vpop.f32.mrf.mxu0
      %v1821 = vadd.f32 0.0, %v1820
      %1822 = vmatmul.f32.gmra.mxu0 %v1777
      %v1823 = vpop.f32.mrf.mxu0
      %v1824 = vadd.f32 0.0, %v1823
      %1825 = vmatmul.f32.gmra.mxu0 %v1780
      %v1826 = vpop.f32.mrf.mxu0
      %v1827 = vadd.f32 0.0, %v1826
      %1828 = vmatmul.f32.gmra.mxu0 %v1783
      %v1829 = vpop.f32.mrf.mxu0
      %v1830 = vadd.f32 0.0, %v1829
      %1831 = vmatmul.f32.gmra.mxu0 %v1786
      %v1832 = vpop.f32.mrf.mxu0
      %v1833 = vadd.f32 0.0, %v1832
      %1834 = vmatmul.f32.gmra.mxu0 %v1789
      %v1835 = vpop.f32.mrf.mxu0
      %v1836 = vadd.f32 0.0, %v1835
      %1837 = vmatmul.f32.gmra.mxu0 %v1792
      %v1838 = vpop.f32.mrf.mxu0
      %v1839 = vadd.f32 0.0, %v1838
      %1840 = vdwg.mxu0
      %v1841 = vadd.f32 %v1723, %v1812
      %v1842 = vadd.f32 %v1726, %v1815
      %v1843 = vadd.f32 %v1729, %v1818
      %v1844 = vadd.f32 %v1732, %v1821
      %v1845 = vadd.f32 %v1735, %v1824
      %v1846 = vadd.f32 %v1738, %v1827
      %v1847 = vadd.f32 %v1741, %v1830
      %v1848 = vadd.f32 %v1744, %v1833
      %v1849 = vadd.f32 %v1747, %v1836
      %v1850 = vadd.f32 %v1750, %v1839
      %v1851 = vld [vmem:[#allocation2 + $0xa] sm:$0xff]
      %v1852 = vld [vmem:[#allocation2 + $0x12] sm:$0xff]
      %v1853 = vld [vmem:[#allocation2 + $0x1a] sm:$0xff]
      %v1854 = vld [vmem:[#allocation2 + $0x22] sm:$0xff]
      %v1855 = vld [vmem:[#allocation2 + $0x2a] sm:$0xff]
      %v1856 = vld [vmem:[#allocation2 + $0x32] sm:$0xff]
      %v1857 = vld [vmem:[#allocation2 + $0x3a] sm:$0xff]
      %v1858 = vld [vmem:[#allocation2 + $0x42] sm:$0xff]
      %v1859 = vld [vmem:[#allocation2 + $0x4a] sm:$0xff]
      %v1860 = vld [vmem:[#allocation2 + $0x52] sm:$0xff]
      %s1861 = scalar_lea.vmem %s4, 24
      %v1862 = vld [vmem:[%s1861] sm:$0xff]
      %v1864 = vsel %vm640, %v1851, 0
      %v1867 = vsel %vm640, %v1852, 0
      %v1870 = vsel %vm640, %v1853, 0
      %v1873 = vsel %vm640, %v1854, 0
      %v1876 = vsel %vm640, %v1855, 0
      %v1879 = vsel %vm640, %v1856, 0
      %v1882 = vsel %vm640, %v1857, 0
      %v1885 = vsel %vm640, %v1858, 0
      %v1888 = vsel %vm640, %v1859, 0
      %v1891 = vsel %vm640, %v1860, 0
      %1893 = vmatpush.msra.mxu0 0.0
      %1894 = vmatpush.msra.mxu0 0.0
      %1895 = vmatpush.msra.mxu0 0.0
      %1896 = vmatpush.msra.mxu0 0.0
      %1897 = vmatpush.msra.mxu0 0.0
      %1898 = vmatpush.msra.mxu0 0.0
      %1899 = vmatpush.msra.mxu0 0.0
      %1900 = vmatpush.msra.mxu0 0.0
      %1901 = vmatpush.msra.mxu0 0.0
      %1902 = vmatpush.msra.mxu0 0.0
      %1903 = vmatpush.msra.mxu0 0.0
      %1904 = vmatpush.msra.mxu0 0.0
      %1905 = vmatpush.msra.mxu0 0.0
      %1906 = vmatpush.msra.mxu0 0.0
      %1907 = vmatpush.msra.mxu0 0.0
      %1908 = vmatpush.msra.mxu0 %v1862
      %1909 = vmatmul.f32.gmra.mxu0 %v1864
      %v1910 = vpop.f32.mrf.mxu0
      %v1911 = vadd.f32 0.0, %v1910
      %1912 = vmatmul.f32.gmra.mxu0 %v1867
      %v1913 = vpop.f32.mrf.mxu0
      %v1914 = vadd.f32 0.0, %v1913
      %1915 = vmatmul.f32.gmra.mxu0 %v1870
      %v1916 = vpop.f32.mrf.mxu0
      %v1917 = vadd.f32 0.0, %v1916
      %1918 = vmatmul.f32.gmra.mxu0 %v1873
      %v1919 = vpop.f32.mrf.mxu0
      %v1920 = vadd.f32 0.0, %v1919
      %1921 = vmatmul.f32.gmra.mxu0 %v1876
      %v1922 = vpop.f32.mrf.mxu0
      %v1923 = vadd.f32 0.0, %v1922
      %1924 = vmatmul.f32.gmra.mxu0 %v1879
      %v1925 = vpop.f32.mrf.mxu0
      %v1926 = vadd.f32 0.0, %v1925
      %1927 = vmatmul.f32.gmra.mxu0 %v1882
      %v1928 = vpop.f32.mrf.mxu0
      %v1929 = vadd.f32 0.0, %v1928
      %1930 = vmatmul.f32.gmra.mxu0 %v1885
      %v1931 = vpop.f32.mrf.mxu0
      %v1932 = vadd.f32 0.0, %v1931
      %1933 = vmatmul.f32.gmra.mxu0 %v1888
      %v1934 = vpop.f32.mrf.mxu0
      %v1935 = vadd.f32 0.0, %v1934
      %1936 = vmatmul.f32.gmra.mxu0 %v1891
      %v1937 = vpop.f32.mrf.mxu0
      %v1938 = vadd.f32 0.0, %v1937
      %1939 = vdwg.mxu0
      %v1940 = vadd.f32 %v1841, %v1911
      %v1941 = vadd.f32 %v1842, %v1914
      %v1942 = vadd.f32 %v1843, %v1917
      %v1943 = vadd.f32 %v1844, %v1920
      %v1944 = vadd.f32 %v1845, %v1923
      %v1945 = vadd.f32 %v1846, %v1926
      %v1946 = vadd.f32 %v1847, %v1929
      %v1947 = vadd.f32 %v1848, %v1932
      %v1948 = vadd.f32 %v1849, %v1935
      %v1949 = vadd.f32 %v1850, %v1938
      %v1950 = vld [vmem:[#allocation2 + $0xb] sm:$0xff]
      %v1951 = vld [vmem:[#allocation2 + $0x13] sm:$0xff]
      %v1952 = vld [vmem:[#allocation2 + $0x1b] sm:$0xff]
      %v1953 = vld [vmem:[#allocation2 + $0x23] sm:$0xff]
      %v1954 = vld [vmem:[#allocation2 + $0x2b] sm:$0xff]
      %v1955 = vld [vmem:[#allocation2 + $0x33] sm:$0xff]
      %v1956 = vld [vmem:[#allocation2 + $0x3b] sm:$0xff]
      %v1957 = vld [vmem:[#allocation2 + $0x43] sm:$0xff]
      %v1958 = vld [vmem:[#allocation2 + $0x4b] sm:$0xff]
      %v1959 = vld [vmem:[#allocation2 + $0x53] sm:$0xff]
      %s1960 = scalar_lea.vmem %s4, 32
      %v1961 = vld [vmem:[%s1960] sm:$0xff]
      %v1963 = vsel %vm640, %v1950, 0
      %v1966 = vsel %vm640, %v1951, 0
      %v1969 = vsel %vm640, %v1952, 0
      %v1972 = vsel %vm640, %v1953, 0
      %v1975 = vsel %vm640, %v1954, 0
      %v1978 = vsel %vm640, %v1955, 0
      %v1981 = vsel %vm640, %v1956, 0
      %v1984 = vsel %vm640, %v1957, 0
      %v1987 = vsel %vm640, %v1958, 0
      %v1990 = vsel %vm640, %v1959, 0
      %1992 = vmatpush.msra.mxu0 0.0
      %1993 = vmatpush.msra.mxu0 0.0
      %1994 = vmatpush.msra.mxu0 0.0
      %1995 = vmatpush.msra.mxu0 0.0
      %1996 = vmatpush.msra.mxu0 0.0
      %1997 = vmatpush.msra.mxu0 0.0
      %1998 = vmatpush.msra.mxu0 0.0
      %1999 = vmatpush.msra.mxu0 0.0
      %2000 = vmatpush.msra.mxu0 0.0
      %2001 = vmatpush.msra.mxu0 0.0
      %2002 = vmatpush.msra.mxu0 0.0
      %2003 = vmatpush.msra.mxu0 0.0
      %2004 = vmatpush.msra.mxu0 0.0
      %2005 = vmatpush.msra.mxu0 0.0
      %2006 = vmatpush.msra.mxu0 0.0
      %2007 = vmatpush.msra.mxu0 %v1961
      %2008 = vmatmul.f32.gmra.mxu0 %v1963
      %v2009 = vpop.f32.mrf.mxu0
      %v2010 = vadd.f32 0.0, %v2009
      %2011 = vmatmul.f32.gmra.mxu0 %v1966
      %v2012 = vpop.f32.mrf.mxu0
      %v2013 = vadd.f32 0.0, %v2012
      %2014 = vmatmul.f32.gmra.mxu0 %v1969
      %v2015 = vpop.f32.mrf.mxu0
      %v2016 = vadd.f32 0.0, %v2015
      %2017 = vmatmul.f32.gmra.mxu0 %v1972
      %v2018 = vpop.f32.mrf.mxu0
      %v2019 = vadd.f32 0.0, %v2018
      %2020 = vmatmul.f32.gmra.mxu0 %v1975
      %v2021 = vpop.f32.mrf.mxu0
      %v2022 = vadd.f32 0.0, %v2021
      %2023 = vmatmul.f32.gmra.mxu0 %v1978
      %v2024 = vpop.f32.mrf.mxu0
      %v2025 = vadd.f32 0.0, %v2024
      %2026 = vmatmul.f32.gmra.mxu0 %v1981
      %v2027 = vpop.f32.mrf.mxu0
      %v2028 = vadd.f32 0.0, %v2027
      %2029 = vmatmul.f32.gmra.mxu0 %v1984
      %v2030 = vpop.f32.mrf.mxu0
      %v2031 = vadd.f32 0.0, %v2030
      %2032 = vmatmul.f32.gmra.mxu0 %v1987
      %v2033 = vpop.f32.mrf.mxu0
      %v2034 = vadd.f32 0.0, %v2033
      %2035 = vmatmul.f32.gmra.mxu0 %v1990
      %v2036 = vpop.f32.mrf.mxu0
      %v2037 = vadd.f32 0.0, %v2036
      %2038 = vdwg.mxu0
      %v2039 = vadd.f32 %v1940, %v2010
      %v2040 = vadd.f32 %v1941, %v2013
      %v2041 = vadd.f32 %v1942, %v2016
      %v2042 = vadd.f32 %v1943, %v2019
      %v2043 = vadd.f32 %v1944, %v2022
      %v2044 = vadd.f32 %v1945, %v2025
      %v2045 = vadd.f32 %v1946, %v2028
      %v2046 = vadd.f32 %v1947, %v2031
      %v2047 = vadd.f32 %v1948, %v2034
      %v2048 = vadd.f32 %v1949, %v2037
      %v2049 = vld [vmem:[#allocation2 + $0xc] sm:$0xff]
      %v2050 = vld [vmem:[#allocation2 + $0x14] sm:$0xff]
      %v2051 = vld [vmem:[#allocation2 + $0x1c] sm:$0xff]
      %v2052 = vld [vmem:[#allocation2 + $0x24] sm:$0xff]
      %v2053 = vld [vmem:[#allocation2 + $0x2c] sm:$0xff]
      %v2054 = vld [vmem:[#allocation2 + $0x34] sm:$0xff]
      %v2055 = vld [vmem:[#allocation2 + $0x3c] sm:$0xff]
      %v2056 = vld [vmem:[#allocation2 + $0x44] sm:$0xff]
      %v2057 = vld [vmem:[#allocation2 + $0x4c] sm:$0xff]
      %v2058 = vld [vmem:[#allocation2 + $0x54] sm:$0xff]
      %s2059 = scalar_lea.vmem %s4, 40
      %v2060 = vld [vmem:[%s2059] sm:$0xff]
      %v2062 = vsel %vm640, %v2049, 0
      %v2065 = vsel %vm640, %v2050, 0
      %v2068 = vsel %vm640, %v2051, 0
      %v2071 = vsel %vm640, %v2052, 0
      %v2074 = vsel %vm640, %v2053, 0
      %v2077 = vsel %vm640, %v2054, 0
      %v2080 = vsel %vm640, %v2055, 0
      %v2083 = vsel %vm640, %v2056, 0
      %v2086 = vsel %vm640, %v2057, 0
      %v2089 = vsel %vm640, %v2058, 0
      %2091 = vmatpush.msra.mxu0 0.0
      %2092 = vmatpush.msra.mxu0 0.0
      %2093 = vmatpush.msra.mxu0 0.0
      %2094 = vmatpush.msra.mxu0 0.0
      %2095 = vmatpush.msra.mxu0 0.0
      %2096 = vmatpush.msra.mxu0 0.0
      %2097 = vmatpush.msra.mxu0 0.0
      %2098 = vmatpush.msra.mxu0 0.0
      %2099 = vmatpush.msra.mxu0 0.0
      %2100 = vmatpush.msra.mxu0 0.0
      %2101 = vmatpush.msra.mxu0 0.0
      %2102 = vmatpush.msra.mxu0 0.0
      %2103 = vmatpush.msra.mxu0 0.0
      %2104 = vmatpush.msra.mxu0 0.0
      %2105 = vmatpush.msra.mxu0 0.0
      %2106 = vmatpush.msra.mxu0 %v2060
      %2107 = vmatmul.f32.gmra.mxu0 %v2062
      %v2108 = vpop.f32.mrf.mxu0
      %v2109 = vadd.f32 0.0, %v2108
      %2110 = vmatmul.f32.gmra.mxu0 %v2065
      %v2111 = vpop.f32.mrf.mxu0
      %v2112 = vadd.f32 0.0, %v2111
      %2113 = vmatmul.f32.gmra.mxu0 %v2068
      %v2114 = vpop.f32.mrf.mxu0
      %v2115 = vadd.f32 0.0, %v2114
      %2116 = vmatmul.f32.gmra.mxu0 %v2071
      %v2117 = vpop.f32.mrf.mxu0
      %v2118 = vadd.f32 0.0, %v2117
      %2119 = vmatmul.f32.gmra.mxu0 %v2074
      %v2120 = vpop.f32.mrf.mxu0
      %v2121 = vadd.f32 0.0, %v2120
      %2122 = vmatmul.f32.gmra.mxu0 %v2077
      %v2123 = vpop.f32.mrf.mxu0
      %v2124 = vadd.f32 0.0, %v2123
      %2125 = vmatmul.f32.gmra.mxu0 %v2080
      %v2126 = vpop.f32.mrf.mxu0
      %v2127 = vadd.f32 0.0, %v2126
      %2128 = vmatmul.f32.gmra.mxu0 %v2083
      %v2129 = vpop.f32.mrf.mxu0
      %v2130 = vadd.f32 0.0, %v2129
      %2131 = vmatmul.f32.gmra.mxu0 %v2086
      %v2132 = vpop.f32.mrf.mxu0
      %v2133 = vadd.f32 0.0, %v2132
      %2134 = vmatmul.f32.gmra.mxu0 %v2089
      %v2135 = vpop.f32.mrf.mxu0
      %v2136 = vadd.f32 0.0, %v2135
      %2137 = vdwg.mxu0
      %v2138 = vadd.f32 %v2039, %v2109
      %v2139 = vadd.f32 %v2040, %v2112
      %v2140 = vadd.f32 %v2041, %v2115
      %v2141 = vadd.f32 %v2042, %v2118
      %v2142 = vadd.f32 %v2043, %v2121
      %v2143 = vadd.f32 %v2044, %v2124
      %v2144 = vadd.f32 %v2045, %v2127
      %v2145 = vadd.f32 %v2046, %v2130
      %v2146 = vadd.f32 %v2047, %v2133
      %v2147 = vadd.f32 %v2048, %v2136
      %v2148 = vld [vmem:[#allocation2 + $0x14] sm:$0xff]
      %v2149 = vld [vmem:[#allocation2 + $0x1c] sm:$0xff]
      %v2150 = vld [vmem:[#allocation2 + $0x24] sm:$0xff]
      %v2151 = vld [vmem:[#allocation2 + $0x2c] sm:$0xff]
      %v2152 = vld [vmem:[#allocation2 + $0x34] sm:$0xff]
      %v2153 = vld [vmem:[#allocation2 + $0x3c] sm:$0xff]
      %v2154 = vld [vmem:[#allocation2 + $0x44] sm:$0xff]
      %v2155 = vld [vmem:[#allocation2 + $0x4c] sm:$0xff]
      %v2156 = vld [vmem:[#allocation2 + $0x54] sm:$0xff]
      %v2157 = vld [vmem:[#allocation2 + $0x5c] sm:$0xff]
      %s2158 = scalar_lea.vmem %s4, 48
      %v2159 = vld [vmem:[%s2158] sm:$0xff]
      %v2161 = vsel %vm640, %v2148, 0
      %v2164 = vsel %vm640, %v2149, 0
      %v2167 = vsel %vm640, %v2150, 0
      %v2170 = vsel %vm640, %v2151, 0
      %v2173 = vsel %vm640, %v2152, 0
      %v2176 = vsel %vm640, %v2153, 0
      %v2179 = vsel %vm640, %v2154, 0
      %v2182 = vsel %vm640, %v2155, 0
      %v2185 = vsel %vm640, %v2156, 0
      %v2188 = vsel %vm640, %v2157, 0
      %2190 = vmatpush.msra.mxu0 0.0
      %2191 = vmatpush.msra.mxu0 0.0
      %2192 = vmatpush.msra.mxu0 0.0
      %2193 = vmatpush.msra.mxu0 0.0
      %2194 = vmatpush.msra.mxu0 0.0
      %2195 = vmatpush.msra.mxu0 0.0
      %2196 = vmatpush.msra.mxu0 0.0
      %2197 = vmatpush.msra.mxu0 0.0
      %2198 = vmatpush.msra.mxu0 0.0
      %2199 = vmatpush.msra.mxu0 0.0
      %2200 = vmatpush.msra.mxu0 0.0
      %2201 = vmatpush.msra.mxu0 0.0
      %2202 = vmatpush.msra.mxu0 0.0
      %2203 = vmatpush.msra.mxu0 0.0
      %2204 = vmatpush.msra.mxu0 0.0
      %2205 = vmatpush.msra.mxu0 %v2159
      %2206 = vmatmul.f32.gmra.mxu0 %v2161
      %v2207 = vpop.f32.mrf.mxu0
      %v2208 = vadd.f32 0.0, %v2207
      %2209 = vmatmul.f32.gmra.mxu0 %v2164
      %v2210 = vpop.f32.mrf.mxu0
      %v2211 = vadd.f32 0.0, %v2210
      %2212 = vmatmul.f32.gmra.mxu0 %v2167
      %v2213 = vpop.f32.mrf.mxu0
      %v2214 = vadd.f32 0.0, %v2213
      %2215 = vmatmul.f32.gmra.mxu0 %v2170
      %v2216 = vpop.f32.mrf.mxu0
      %v2217 = vadd.f32 0.0, %v2216
      %2218 = vmatmul.f32.gmra.mxu0 %v2173
      %v2219 = vpop.f32.mrf.mxu0
      %v2220 = vadd.f32 0.0, %v2219
      %2221 = vmatmul.f32.gmra.mxu0 %v2176
      %v2222 = vpop.f32.mrf.mxu0
      %v2223 = vadd.f32 0.0, %v2222
      %2224 = vmatmul.f32.gmra.mxu0 %v2179
      %v2225 = vpop.f32.mrf.mxu0
      %v2226 = vadd.f32 0.0, %v2225
      %2227 = vmatmul.f32.gmra.mxu0 %v2182
      %v2228 = vpop.f32.mrf.mxu0
      %v2229 = vadd.f32 0.0, %v2228
      %2230 = vmatmul.f32.gmra.mxu0 %v2185
      %v2231 = vpop.f32.mrf.mxu0
      %v2232 = vadd.f32 0.0, %v2231
      %2233 = vmatmul.f32.gmra.mxu0 %v2188
      %v2234 = vpop.f32.mrf.mxu0
      %v2235 = vadd.f32 0.0, %v2234
      %2236 = vdwg.mxu0
      %v2237 = vadd.f32 %v2138, %v2208
      %v2238 = vadd.f32 %v2139, %v2211
      %v2239 = vadd.f32 %v2140, %v2214
      %v2240 = vadd.f32 %v2141, %v2217
      %v2241 = vadd.f32 %v2142, %v2220
      %v2242 = vadd.f32 %v2143, %v2223
      %v2243 = vadd.f32 %v2144, %v2226
      %v2244 = vadd.f32 %v2145, %v2229
      %v2245 = vadd.f32 %v2146, %v2232
      %v2246 = vadd.f32 %v2147, %v2235
      %v2247 = vld [vmem:[#allocation2 + $0x15] sm:$0xff]
      %v2248 = vld [vmem:[#allocation2 + $0x1d] sm:$0xff]
      %v2249 = vld [vmem:[#allocation2 + $0x25] sm:$0xff]
      %v2250 = vld [vmem:[#allocation2 + $0x2d] sm:$0xff]
      %v2251 = vld [vmem:[#allocation2 + $0x35] sm:$0xff]
      %v2252 = vld [vmem:[#allocation2 + $0x3d] sm:$0xff]
      %v2253 = vld [vmem:[#allocation2 + $0x45] sm:$0xff]
      %v2254 = vld [vmem:[#allocation2 + $0x4d] sm:$0xff]
      %v2255 = vld [vmem:[#allocation2 + $0x55] sm:$0xff]
      %v2256 = vld [vmem:[#allocation2 + $0x5d] sm:$0xff]
      %s2257 = scalar_lea.vmem %s4, 56
      %v2258 = vld [vmem:[%s2257] sm:$0xff]
      %v2260 = vsel %vm640, %v2247, 0
      %v2263 = vsel %vm640, %v2248, 0
      %v2266 = vsel %vm640, %v2249, 0
      %v2269 = vsel %vm640, %v2250, 0
      %v2272 = vsel %vm640, %v2251, 0
      %v2275 = vsel %vm640, %v2252, 0
      %v2278 = vsel %vm640, %v2253, 0
      %v2281 = vsel %vm640, %v2254, 0
      %v2284 = vsel %vm640, %v2255, 0
      %v2287 = vsel %vm640, %v2256, 0
      %2289 = vmatpush.msra.mxu0 0.0
      %2290 = vmatpush.msra.mxu0 0.0
      %2291 = vmatpush.msra.mxu0 0.0
      %2292 = vmatpush.msra.mxu0 0.0
      %2293 = vmatpush.msra.mxu0 0.0
      %2294 = vmatpush.msra.mxu0 0.0
      %2295 = vmatpush.msra.mxu0 0.0
      %2296 = vmatpush.msra.mxu0 0.0
      %2297 = vmatpush.msra.mxu0 0.0
      %2298 = vmatpush.msra.mxu0 0.0
      %2299 = vmatpush.msra.mxu0 0.0
      %2300 = vmatpush.msra.mxu0 0.0
      %2301 = vmatpush.msra.mxu0 0.0
      %2302 = vmatpush.msra.mxu0 0.0
      %2303 = vmatpush.msra.mxu0 0.0
      %2304 = vmatpush.msra.mxu0 %v2258
      %2305 = vmatmul.f32.gmra.mxu0 %v2260
      %v2306 = vpop.f32.mrf.mxu0
      %v2307 = vadd.f32 0.0, %v2306
      %2308 = vmatmul.f32.gmra.mxu0 %v2263
      %v2309 = vpop.f32.mrf.mxu0
      %v2310 = vadd.f32 0.0, %v2309
      %2311 = vmatmul.f32.gmra.mxu0 %v2266
      %v2312 = vpop.f32.mrf.mxu0
      %v2313 = vadd.f32 0.0, %v2312
      %2314 = vmatmul.f32.gmra.mxu0 %v2269
      %v2315 = vpop.f32.mrf.mxu0
      %v2316 = vadd.f32 0.0, %v2315
      %2317 = vmatmul.f32.gmra.mxu0 %v2272
      %v2318 = vpop.f32.mrf.mxu0
      %v2319 = vadd.f32 0.0, %v2318
      %2320 = vmatmul.f32.gmra.mxu0 %v2275
      %v2321 = vpop.f32.mrf.mxu0
      %v2322 = vadd.f32 0.0, %v2321
      %2323 = vmatmul.f32.gmra.mxu0 %v2278
      %v2324 = vpop.f32.mrf.mxu0
      %v2325 = vadd.f32 0.0, %v2324
      %2326 = vmatmul.f32.gmra.mxu0 %v2281
      %v2327 = vpop.f32.mrf.mxu0
      %v2328 = vadd.f32 0.0, %v2327
      %2329 = vmatmul.f32.gmra.mxu0 %v2284
      %v2330 = vpop.f32.mrf.mxu0
      %v2331 = vadd.f32 0.0, %v2330
      %2332 = vmatmul.f32.gmra.mxu0 %v2287
      %v2333 = vpop.f32.mrf.mxu0
      %v2334 = vadd.f32 0.0, %v2333
      %2335 = vdwg.mxu0
      %v2336 = vadd.f32 %v2237, %v2307
      %v2337 = vadd.f32 %v2238, %v2310
      %v2338 = vadd.f32 %v2239, %v2313
      %v2339 = vadd.f32 %v2240, %v2316
      %v2340 = vadd.f32 %v2241, %v2319
      %v2341 = vadd.f32 %v2242, %v2322
      %v2342 = vadd.f32 %v2243, %v2325
      %v2343 = vadd.f32 %v2244, %v2328
      %v2344 = vadd.f32 %v2245, %v2331
      %v2345 = vadd.f32 %v2246, %v2334
      %v2346 = vld [vmem:[#allocation2 + $0x16] sm:$0xff]
      %v2347 = vld [vmem:[#allocation2 + $0x1e] sm:$0xff]
      %v2348 = vld [vmem:[#allocation2 + $0x26] sm:$0xff]
      %v2349 = vld [vmem:[#allocation2 + $0x2e] sm:$0xff]
      %v2350 = vld [vmem:[#allocation2 + $0x36] sm:$0xff]
      %v2351 = vld [vmem:[#allocation2 + $0x3e] sm:$0xff]
      %v2352 = vld [vmem:[#allocation2 + $0x46] sm:$0xff]
      %v2353 = vld [vmem:[#allocation2 + $0x4e] sm:$0xff]
      %v2354 = vld [vmem:[#allocation2 + $0x56] sm:$0xff]
      %v2355 = vld [vmem:[#allocation2 + $0x5e] sm:$0xff]
      %s2356 = scalar_lea.vmem %s4, 64
      %v2357 = vld [vmem:[%s2356] sm:$0xff]
      %v2359 = vsel %vm640, %v2346, 0
      %v2362 = vsel %vm640, %v2347, 0
      %v2365 = vsel %vm640, %v2348, 0
      %v2368 = vsel %vm640, %v2349, 0
      %v2371 = vsel %vm640, %v2350, 0
      %v2374 = vsel %vm640, %v2351, 0
      %v2377 = vsel %vm640, %v2352, 0
      %v2380 = vsel %vm640, %v2353, 0
      %v2383 = vsel %vm640, %v2354, 0
      %v2386 = vsel %vm640, %v2355, 0
      %2388 = vmatpush.msra.mxu0 0.0
      %2389 = vmatpush.msra.mxu0 0.0
      %2390 = vmatpush.msra.mxu0 0.0
      %2391 = vmatpush.msra.mxu0 0.0
      %2392 = vmatpush.msra.mxu0 0.0
      %2393 = vmatpush.msra.mxu0 0.0
      %2394 = vmatpush.msra.mxu0 0.0
      %2395 = vmatpush.msra.mxu0 0.0
      %2396 = vmatpush.msra.mxu0 0.0
      %2397 = vmatpush.msra.mxu0 0.0
      %2398 = vmatpush.msra.mxu0 0.0
      %2399 = vmatpush.msra.mxu0 0.0
      %2400 = vmatpush.msra.mxu0 0.0
      %2401 = vmatpush.msra.mxu0 0.0
      %2402 = vmatpush.msra.mxu0 0.0
      %2403 = vmatpush.msra.mxu0 %v2357
      %2404 = vmatmul.f32.gmra.mxu0 %v2359
      %v2405 = vpop.f32.mrf.mxu0
      %v2406 = vadd.f32 0.0, %v2405
      %2407 = vmatmul.f32.gmra.mxu0 %v2362
      %v2408 = vpop.f32.mrf.mxu0
      %v2409 = vadd.f32 0.0, %v2408
      %2410 = vmatmul.f32.gmra.mxu0 %v2365
      %v2411 = vpop.f32.mrf.mxu0
      %v2412 = vadd.f32 0.0, %v2411
      %2413 = vmatmul.f32.gmra.mxu0 %v2368
      %v2414 = vpop.f32.mrf.mxu0
      %v2415 = vadd.f32 0.0, %v2414
      %2416 = vmatmul.f32.gmra.mxu0 %v2371
      %v2417 = vpop.f32.mrf.mxu0
      %v2418 = vadd.f32 0.0, %v2417
      %2419 = vmatmul.f32.gmra.mxu0 %v2374
      %v2420 = vpop.f32.mrf.mxu0
      %v2421 = vadd.f32 0.0, %v2420
      %2422 = vmatmul.f32.gmra.mxu0 %v2377
      %v2423 = vpop.f32.mrf.mxu0
      %v2424 = vadd.f32 0.0, %v2423
      %2425 = vmatmul.f32.gmra.mxu0 %v2380
      %v2426 = vpop.f32.mrf.mxu0
      %v2427 = vadd.f32 0.0, %v2426
      %2428 = vmatmul.f32.gmra.mxu0 %v2383
      %v2429 = vpop.f32.mrf.mxu0
      %v2430 = vadd.f32 0.0, %v2429
      %2431 = vmatmul.f32.gmra.mxu0 %v2386
      %v2432 = vpop.f32.mrf.mxu0
      %v2433 = vadd.f32 0.0, %v2432
      %2434 = vdwg.mxu0
      %v2435 = vadd.f32 %v2336, %v2406
      %v2436 = vadd.f32 %v2337, %v2409
      %v2437 = vadd.f32 %v2338, %v2412
      %v2438 = vadd.f32 %v2339, %v2415
      %v2439 = vadd.f32 %v2340, %v2418
      %v2440 = vadd.f32 %v2341, %v2421
      %v2441 = vadd.f32 %v2342, %v2424
      %v2442 = vadd.f32 %v2343, %v2427
      %v2443 = vadd.f32 %v2344, %v2430
      %v2444 = vadd.f32 %v2345, %v2433
      %v2445 = vld [vmem:[%s273 + $0xb] sm:$0xff]
      %v2446 = vld [vmem:[%s273 + $0x13] sm:$0xff]
      %v2447 = vld [vmem:[%s273 + $0x1b] sm:$0xff]
      %v2448 = vld [vmem:[%s273 + $0x23] sm:$0xff]
      %v2449 = vld [vmem:[%s273 + $0x2b] sm:$0xff]
      %v2450 = vld [vmem:[%s273 + $0x33] sm:$0xff]
      %v2451 = vld [vmem:[%s273 + $0x3b] sm:$0xff]
      %v2452 = vld [vmem:[%s273 + $0x43] sm:$0xff]
      %v2453 = vld [vmem:[%s273 + $0x4b] sm:$0xff]
      %v2454 = vld [vmem:[%s273 + $0x53] sm:$0xff]
      %v2455 = vld [vmem:[%s5] sm:$0x1]
      %v2457 = vperm.slane %v2455, 0
      %v2459 = vmul.f32 %v2435, %v2457
      %v2460 = vmul.f32 %v2436, %v2457
      %v2461 = vmul.f32 %v2437, %v2457
      %v2462 = vmul.f32 %v2438, %v2457
      %v2463 = vmul.f32 %v2439, %v2457
      %v2464 = vmul.f32 %v2440, %v2457
      %v2465 = vmul.f32 %v2441, %v2457
      %v2466 = vmul.f32 %v2442, %v2457
      %v2467 = vmul.f32 %v2443, %v2457
      %v2468 = vmul.f32 %v2444, %v2457
      %v2469 = vld [vmem:[%s6] sm:$0x1]
      %v2471 = vperm.slane %v2469, 0
      %v2473 = vadd.f32 %v2459, %v2471
      %v2474 = vadd.f32 %v2460, %v2471
      %v2475 = vadd.f32 %v2461, %v2471
      %v2476 = vadd.f32 %v2462, %v2471
      %v2477 = vadd.f32 %v2463, %v2471
      %v2478 = vadd.f32 %v2464, %v2471
      %v2479 = vadd.f32 %v2465, %v2471
      %v2480 = vadd.f32 %v2466, %v2471
      %v2481 = vadd.f32 %v2467, %v2471
      %v2482 = vadd.f32 %v2468, %v2471
      %v2483 = vadd.f32 %v2473, %v2445
      %v2484 = vadd.f32 %v2474, %v2446
      %v2485 = vadd.f32 %v2475, %v2447
      %v2486 = vadd.f32 %v2476, %v2448
      %v2487 = vadd.f32 %v2477, %v2449
      %v2488 = vadd.f32 %v2478, %v2450
      %v2489 = vadd.f32 %v2479, %v2451
      %v2490 = vadd.f32 %v2480, %v2452
      %v2491 = vadd.f32 %v2481, %v2453
      %v2492 = vadd.f32 %v2482, %v2454
      %v2493 = vmax.f32 %v2483, 0.0
      %v2494 = vmax.f32 %v2484, 0.0
      %v2495 = vmax.f32 %v2485, 0.0
      %v2496 = vmax.f32 %v2486, 0.0
      %v2497 = vmax.f32 %v2487, 0.0
      %v2498 = vmax.f32 %v2488, 0.0
      %v2499 = vmax.f32 %v2489, 0.0
      %v2500 = vmax.f32 %v2490, 0.0
      %v2501 = vmax.f32 %v2491, 0.0
      %v2502 = vmax.f32 %v2492, 0.0
      %2503 = vst.msk [vmem:[%s278] sm:$0xff] %vm640, %v2493
      %2504 = vst.msk [vmem:[%s278 + $0x8] sm:$0xff] %vm640, %v2494
      %2505 = vst.msk [vmem:[%s278 + $0x10] sm:$0xff] %vm640, %v2495
      %2506 = vst.msk [vmem:[%s278 + $0x18] sm:$0xff] %vm640, %v2496
      %2507 = vst.msk [vmem:[%s278 + $0x20] sm:$0xff] %vm640, %v2497
      %2508 = vst.msk [vmem:[%s278 + $0x28] sm:$0xff] %vm640, %v2498
      %2509 = vst.msk [vmem:[%s278 + $0x30] sm:$0xff] %vm640, %v2499
      %2510 = vst.msk [vmem:[%s278 + $0x38] sm:$0xff] %vm640, %v2500
      %2511 = vst.msk [vmem:[%s278 + $0x40] sm:$0xff] %vm640, %v2501
      %2512 = vst.msk [vmem:[%s278 + $0x48] sm:$0xff] %vm640, %v2502
      %p2513 = scmp.lt.s32.totalorder %s18, 1
      %s2514 = scalar_select %p2513, %s18, 1
      %s2515 = smul.addr %s2514, 10
      %s2516 = smul.addr %s2515, 8
      %s2517 = scalar_lea.vmem %s7, %s2516
      // Predicated region
      $region49: #{residual_block_forward.1} parent=47 // pred_check
        %p2518 = pneg %p188
      $region50: #{residual_block_forward.1} parent=47 // pred_check_branch
        %2520 = sbr.rel (%p2518) target = $region52
      $region51: #{residual_block_forward.1} parent=47 // pred_region
        _
      $region52: #{residual_block_forward.1} parent=47 // pred_fallthru
        _
    $region48: #{residual_block_forward.1} parent=5 // pred_fallthru
      _
    %p2521 = scmp.le.s32.totalorder 2, %s13
    // Predicated region
    $region53: #{residual_block_forward.1} parent=5 // pred_check
      %p2522 = pneg %p2521
    $region54: #{residual_block_forward.1} parent=5 // pred_check_branch
      %2524 = sbr.rel (%p2522) target = $region56
    $region55: #{residual_block_forward.1} parent=5 // pred_region
      %s2525 = ssub.s32 %s13, 2
      // Predicated region
      $region57: #{residual_block_forward.1} parent=55 // pred_check
        %p2526 = pneg %p194
      $region58: #{residual_block_forward.1} parent=55 // pred_check_branch
        %2528 = sbr.rel (%p2526) target = $region60
      $region59: #{residual_block_forward.1} parent=55 // pred_region
        %p2529 = scmp.lt.s32.totalorder %s19, 1
        %s2530 = scalar_select %p2529, %s19, 1
        %s2531 = smul.addr %s2530, 10
        %s2532 = smul.addr %s2531, 8
        %s2533 = scalar_lea.vmem %s7, %s2532
      $region60: #{residual_block_forward.1} parent=55 // pred_fallthru
        _
    $region56: #{residual_block_forward.1} parent=5 // pred_fallthru
      _
  $region6: #{residual_block_forward.1} parent=0 // loop_footer
    %s17 = sadd.s32 1, %s13
  $region7: #{residual_block_forward.1} parent=0 // loop_footer_branch
    %12 = sbr.rel target = $region3
  $region8: #{residual_block_forward.1} parent=0 // loop_exit
    _

</llo_original>
